<compile_context>
chip_gen: v7x
topology: tpu7x:2x2x1
jax: 0.10.0
libtpu: 0.0.40
codegen_flags: <defaults>
</compile_context>

<pallas_src>
import math
import functools

import jax
import jax.numpy as jnp
from jax.experimental import pallas as pl
from jax.experimental.pallas import tpu as pltpu

EPS = 1e-5
HIGHEST = jax.lax.Precision.HIGHEST


# ---------------------------------------------------------------- helpers ----

def _layernorm(x, gamma, beta):
    mu = jnp.mean(x, axis=-1, keepdims=True)
    xc = x - mu
    var = jnp.mean(xc * xc, axis=-1, keepdims=True)
    return xc * jax.lax.rsqrt(var + EPS) * gamma + beta


def _gelu_tanh(x):
    # tanh approximation of GELU (tanh -> EUP, few VPU ops); |err| vs exact erf
    # GELU <= ~3e-4, far inside the test tolerance.
    c = 0.7978845608028654  # sqrt(2/pi)
    return 0.5 * x * (1.0 + jnp.tanh(c * (x + 0.044715 * x * x * x)))


def _bdot(a, b):
    # bf16 x bf16 -> f32 accumulation on the MXU (single pass).
    return jnp.dot(a, b, preferred_element_type=jnp.float32)


# ----------------------------------------------------------------- kernel ----

def _block_kernel(x_ref, g1_ref, b1_ref, mf_ref, wr_ref, wi_ref, minv_ref,
                  g2_ref, b2_ref, w1_ref, bb1_ref, w2_ref, bb2_ref, o_ref,
                  *, n_tok, fr, bb):
    """One batch chunk per grid step.

    x_ref : (bb * n_tok, C) rows = (image, token) row-major.
    mf_ref: (2*fr, n_tok)   stacked [Mfr; Mfi]   (bf16)
    minv  : (n_tok, 2*fr)   stacked [Br | Bi]    (bf16)
    wr/wi : (fr, C)         spectral gate weights (f32)
    """
    x = x_ref[...]                                         # (bb*N, C)  f32

    # ---- LayerNorm 1 on the whole flattened row slab ----
    ln1 = _layernorm(x, g1_ref[...], b1_ref[...]).astype(jnp.bfloat16)

    mf = mf_ref[...]                                       # (2fr, N)   bf16
    minv = minv_ref[...]                                   # (N, 2fr)   bf16
    wr = wr_ref[...]                                       # (fr, C)    f32
    wi = wi_ref[...]

    # ---- SpectralGatingNetwork: rfft2 -> complex gate -> irfft2 ----
    # Forward + inverse 2-D real FFTs are single fused matmuls per image
    # (real/imag stacked along the contraction / row axis).
    gates = []
    for b in range(bb):                                    # tiny static unroll
        d = ln1[b * n_tok:(b + 1) * n_tok, :]              # (N, C) bf16
        xst = _bdot(mf, d)                                 # (2fr, C) f32 = [xr; xi]
        xr = xst[:fr]
        xi = xst[fr:]
        yr = xr * wr - xi * wi                             # complex gate (f32 VPU)
        yi = xr * wi + xi * wr
        yst = jnp.concatenate([yr, yi], axis=0).astype(jnp.bfloat16)   # (2fr, C)
        gates.append(_bdot(minv, yst))                     # (N, C) f32
    gate = jnp.concatenate(gates, axis=0)                  # (bb*N, C) f32

    # ---- LayerNorm 2 + MLP (GELU); "x + Identity(x)" folded into w2/b2 ----
    ln2 = _layernorm(gate, g2_ref[...], b2_ref[...]).astype(jnp.bfloat16)
    h = _bdot(ln2, w1_ref[...]) + bb1_ref[...]             # (bb*N, H) f32
    h = _gelu_tanh(h).astype(jnp.bfloat16)
    o_ref[...] = _bdot(h, w2_ref[...]) + bb2_ref[...]      # (bb*N, C) f32


# ---------------------------------------------------------------- wrapper ----

def spectformer_block(x, params, block_b=None):
    B, N, C = x.shape
    mats = list(params)
    fr = mats[3].shape[0]                  # wr is (a*wf, C)

    if block_b is None:
        # Whole batch per grid step at small sizes (amortise the ~0.35 us per-step
        # overhead).  At large B pick the largest divisor of B that keeps
        # block_b*N in the 256..1024 row range and leaves an even grid for the
        # two v7x TensorCores.
        block_b = B
    assert B % block_b == 0, "block_b must divide B"
    grid_b = B // block_b

    # Free host-side flatten: rows ordered (image, token) so batch chunks are
    # contiguous row blocks of the same 2-D slab.
    x2 = x.reshape(B * N, C)

    kernel = functools.partial(_block_kernel, n_tok=N, fr=fr, bb=block_b)

    def _weight_spec(shape):
        # Resident weights: constant index_map -> single-buffer them to halve
        # their VMEM footprint.  Fall back gracefully if this Pallas version
        # does not expose pipeline_mode.
        idx = lambda i: (0,) * len(shape)
        try:
            return pl.BlockSpec(shape, idx, pipeline_mode=pl.Buffered(1))
        except TypeError:
            return pl.BlockSpec(shape, idx)

    out2 = pl.pallas_call(
        kernel,
        out_shape=jax.ShapeDtypeStruct((B * N, C), jnp.float32),
        grid=(grid_b,),
        in_specs=[pl.BlockSpec((block_b * N, C), lambda i: (i, 0))]
                 + [_weight_spec(m.shape) for m in mats],
        out_specs=pl.BlockSpec((block_b * N, C), lambda i: (i, 0)),
        compiler_params=pltpu.CompilerParams(
            dimension_semantics=("parallel",)),
    )(x2, *mats)

    return out2.reshape(B, N, C)


# ------------------------------------------------------- parameter "glue" ----

def make_spectral_mats(complex_weight, a, b):
    """Spatial-only DFT matrices so that, in token layout d: (a*b, C),
         [xr + i*xi] = Mf @ d ,  y = (xr + i*xi) * (wr + i*wi) ,
         gate(d)     = Br @ yr + Bi @ yi
    equals irfft2(rfft2(d.reshape(a,b,C), norm='ortho') * W, s=(a,b), norm='ortho').
    Matrix sizes are O(a^2 * b * wf) -- independent of the channel width C."""
    C = complex_weight.shape[2]
    wf = b // 2 + 1
    assert complex_weight.shape[:2] == (a, wf)
    scale = 1.0 / math.sqrt(a * b)

    p = jnp.arange(a, dtype=jnp.float32)
    j = jnp.arange(a, dtype=jnp.float32)
    q = jnp.arange(wf, dtype=jnp.float32)
    k = jnp.arange(b, dtype=jnp.float32)

    # forward: rows (p, q), cols (j, k);  theta = 2*pi*(p*j/a + q*k/b)
    th_f = 2.0 * jnp.pi * (jnp.outer(p, j)[:, None, :, None] / a
                           + jnp.outer(q, k)[None, :, None, :] / b)
    th_f = th_f.reshape(a * wf, a * b)
    mfr = jnp.cos(th_f) * scale
    mfi = -jnp.sin(th_f) * scale

    # inverse: rows (j, k), cols (p, q);  Hermitian fold -> per-q coefficient
    coef = jnp.full((wf,), 2.0, dtype=jnp.float32).at[0].set(1.0)
    if b % 2 == 0:
        coef = coef.at[wf - 1].set(1.0)        # Nyquist bin counted once
    th_i = 2.0 * jnp.pi * (jnp.outer(j, p)[:, None, :, None] / a
                           + jnp.outer(k, q)[None, :, None, :] / b)
    cf = coef[None, None, None, :]
    br = (cf * jnp.cos(th_i) * scale).reshape(a * b, a * wf)
    bi = (-cf * jnp.sin(th_i) * scale).reshape(a * b, a * wf)

    wr = complex_weight[..., 0].reshape(a * wf, C)
    wi = complex_weight[..., 1].reshape(a * wf, C)
    return mfr, mfi, wr, wi, br, bi


def prepare_params(prm, a, b):
    """Stack real/imag DFT matrices into single MXU operands, bf16-cast the
    matmul operands, keep elementwise params in f32, and fold the trailing 2x
    ('x + Identity(x)') into fc2."""
    mfr, mfi, wr, wi, br, bi = make_spectral_mats(prm["cw"], a, b)
    bf = lambda m: m.astype(jnp.bfloat16)
    mf_stack = jnp.concatenate([mfr, mfi], axis=0)    # (2*a*wf, a*b) forward DFT
    minv = jnp.concatenate([br, bi], axis=1)          # (a*b, 2*a*wf) inverse DFT
    return (prm["g1"], prm["b1"],
            bf(mf_stack), wr, wi, bf(minv),
            prm["g2"], prm["b2"],
            bf(prm["w1"]), prm["bb1"],
            bf(2.0 * prm["w2"]), 2.0 * prm["bb2"])


# -------------------------------------------------------------- reference ----

def reference_block(x, prm):
    def ln(v, g, bt):
        mu = v.mean(-1, keepdims=True)
        var = ((v - mu) ** 2).mean(-1, keepdims=True)
        return (v - mu) / jnp.sqrt(var + EPS) * g + bt

    B, N, C = x.shape
    a = b = int(round(math.sqrt(N)))
    y = ln(x, prm["g1"].reshape(C), prm["b1"].reshape(C))
    ys = y.reshape(B, a, b, C)
    xf = jnp.fft.rfft2(ys, axes=(1, 2), norm="ortho")
    wc = prm["cw"][..., 0] + 1j * prm["cw"][..., 1]
    yf = xf * wc[None]
    g = jnp.fft.irfft2(yf, s=(a, b), axes=(1, 2), norm="ortho").reshape(B, N, C)
    z = ln(g, prm["g2"].reshape(C), prm["b2"].reshape(C)).reshape(B * N, C)
    hp = functools.partial(jnp.dot, precision=HIGHEST)
    h = hp(z, prm["w1"]) + prm["bb1"]
    h = 0.5 * h * (1.0 + jax.scipy.special.erf(h / jnp.sqrt(2.0)))
    m = hp(h, prm["w2"]) + prm["bb2"]
    return (2.0 * m).reshape(B, N, C)


# ------------------------------------------------------------------- main ----

if __name__ == "__main__":
    key = jax.random.PRNGKey(0)
    B, a, C = 2, 8, 32            # small shapes: dim=32, 8x8 tokens -> N=64
    b = a
    N = a * b
    H = int(C * 4.0)              # mlp_ratio = 4.0
    wf = b // 2 + 1               # SpectralGatingNetwork(h=a, w=b//2+1)

    ks = jax.random.split(key, 10)
    x = jax.random.normal(ks[0], (B, N, C), dtype=jnp.float32)
    prm = dict(
        g1=(1.0 + 0.1 * jax.random.normal(ks[1], (1, C))).astype(jnp.float32),
        b1=(0.1 * jax.random.normal(ks[2], (1, C))).astype(jnp.float32),
        g2=(1.0 + 0.1 * jax.random.normal(ks[3], (1, C))).astype(jnp.float32),
        b2=(0.1 * jax.random.normal(ks[4], (1, C))).astype(jnp.float32),
        cw=(0.02 * jax.random.normal(ks[5], (a, wf, C, 2))).astype(jnp.float32),
        w1=(0.1 * jax.random.normal(ks[6], (C, H))).astype(jnp.float32),
        bb1=(0.02 * jax.random.normal(ks[7], (1, H))).astype(jnp.float32),
        w2=(0.1 * jax.random.normal(ks[8], (H, C))).astype(jnp.float32),
        bb2=(0.02 * jax.random.normal(ks[9], (1, C))).astype(jnp.float32),
    )
    params = prepare_params(prm, a, b)

    out = spectformer_block(x, params)
    out = jax.block_until_ready(out)

    ref = reference_block(x, prm)
    err = float(jnp.max(jnp.abs(out - ref)))
    scale = float(jnp.max(jnp.abs(ref))) + 1e-8
    assert err / scale < 2e-2, f"kernel/reference mismatch: rel_err={err / scale}"
    print("KERNEL_OK")
</pallas_src>

<mosaic_0001>
module attributes {stable_mosaic.version = 11 : i64} {
  func.func @_block_kernel(%arg0: i32, %arg1: memref<128x32xf32, #tpu.memory_space<vmem>>, %arg2: memref<1x32xf32, #tpu.memory_space<vmem>>, %arg3: memref<1x32xf32, #tpu.memory_space<vmem>>, %arg4: memref<80x64xbf16, #tpu.memory_space<vmem>>, %arg5: memref<40x32xf32, #tpu.memory_space<vmem>>, %arg6: memref<40x32xf32, #tpu.memory_space<vmem>>, %arg7: memref<64x80xbf16, #tpu.memory_space<vmem>>, %arg8: memref<1x32xf32, #tpu.memory_space<vmem>>, %arg9: memref<1x32xf32, #tpu.memory_space<vmem>>, %arg10: memref<32x128xbf16, #tpu.memory_space<vmem>>, %arg11: memref<1x128xf32, #tpu.memory_space<vmem>>, %arg12: memref<128x32xbf16, #tpu.memory_space<vmem>>, %arg13: memref<1x32xf32, #tpu.memory_space<vmem>>, %arg14: memref<128x32xf32, #tpu.memory_space<vmem>>) attributes {dimension_semantics = [#tpu.dimension_semantics<parallel>], iteration_bounds = array<i64: 1>, scalar_prefetch = 0 : i64, scratch_operands = 0 : i64, tpu.core_type = #tpu.core_type<tc>, window_params = [{transform_indices = @transform_0, window_bounds = array<i64: 128, 32>}, {pipeline_mode = #tpu.pipeline_mode<synchronous>, transform_indices = @transform_1, window_bounds = array<i64: 1, 32>}, {pipeline_mode = #tpu.pipeline_mode<synchronous>, transform_indices = @transform_2, window_bounds = array<i64: 1, 32>}, {pipeline_mode = #tpu.pipeline_mode<synchronous>, transform_indices = @transform_3, window_bounds = array<i64: 80, 64>}, {pipeline_mode = #tpu.pipeline_mode<synchronous>, transform_indices = @transform_4, window_bounds = array<i64: 40, 32>}, {pipeline_mode = #tpu.pipeline_mode<synchronous>, transform_indices = @transform_5, window_bounds = array<i64: 40, 32>}, {pipeline_mode = #tpu.pipeline_mode<synchronous>, transform_indices = @transform_6, window_bounds = array<i64: 64, 80>}, {pipeline_mode = #tpu.pipeline_mode<synchronous>, transform_indices = @transform_7, window_bounds = array<i64: 1, 32>}, {pipeline_mode = #tpu.pipeline_mode<synchronous>, transform_indices = @transform_8, window_bounds = array<i64: 1, 32>}, {pipeline_mode = #tpu.pipeline_mode<synchronous>, transform_indices = @transform_9, window_bounds = array<i64: 32, 128>}, {pipeline_mode = #tpu.pipeline_mode<synchronous>, transform_indices = @transform_10, window_bounds = array<i64: 1, 128>}, {pipeline_mode = #tpu.pipeline_mode<synchronous>, transform_indices = @transform_11, window_bounds = array<i64: 128, 32>}, {pipeline_mode = #tpu.pipeline_mode<synchronous>, transform_indices = @transform_12, window_bounds = array<i64: 1, 32>}, {transform_indices = @transform_13, window_bounds = array<i64: 128, 32>}]} {
    %c0 = arith.constant 0 : index
    %c0_0 = arith.constant 0 : index
    %0 = vector.load %arg1[%c0, %c0_0] : memref<128x32xf32, #tpu.memory_space<vmem>>, vector<128x32xf32>
    %c0_1 = arith.constant 0 : index
    %c0_2 = arith.constant 0 : index
    %1 = vector.load %arg2[%c0_1, %c0_2] : memref<1x32xf32, #tpu.memory_space<vmem>>, vector<1x32xf32>
    %c0_3 = arith.constant 0 : index
    %c0_4 = arith.constant 0 : index
    %2 = vector.load %arg3[%c0_3, %c0_4] : memref<1x32xf32, #tpu.memory_space<vmem>>, vector<1x32xf32>
    %cst = arith.constant dense<0.000000e+00> : vector<128xf32>
    %3 = vector.multi_reduction <add>, %0, %cst [1] : vector<128x32xf32> to vector<128xf32>
    %4 = vector.shape_cast %3 : vector<128xf32> to vector<128x1xf32>
    %cst_5 = arith.constant 3.200000e+01 : f32
    %5 = vector.broadcast %cst_5 : f32 to vector<128x1xf32>
    %6 = arith.divf %4, %5 : vector<128x1xf32>
    %7 = vector.broadcast %6 : vector<128x1xf32> to vector<128x32xf32>
    %8 = arith.subf %0, %7 : vector<128x32xf32>
    %9 = arith.mulf %8, %8 : vector<128x32xf32>
    %cst_6 = arith.constant dense<0.000000e+00> : vector<128xf32>
    %10 = vector.multi_reduction <add>, %9, %cst_6 [1] : vector<128x32xf32> to vector<128xf32>
    %11 = vector.shape_cast %10 : vector<128xf32> to vector<128x1xf32>
    %cst_7 = arith.constant 3.200000e+01 : f32
    %12 = vector.broadcast %cst_7 : f32 to vector<128x1xf32>
    %13 = arith.divf %11, %12 : vector<128x1xf32>
    %cst_8 = arith.constant 9.99999974E-6 : f32
    %14 = vector.broadcast %cst_8 : f32 to vector<128x1xf32>
    %15 = arith.addf %13, %14 : vector<128x1xf32>
    %16 = math.rsqrt %15 : vector<128x1xf32>
    %17 = vector.broadcast %16 : vector<128x1xf32> to vector<128x32xf32>
    %18 = arith.mulf %8, %17 : vector<128x32xf32>
    %19 = vector.broadcast %1 : vector<1x32xf32> to vector<128x32xf32>
    %20 = arith.mulf %18, %19 : vector<128x32xf32>
    %21 = vector.broadcast %2 : vector<1x32xf32> to vector<128x32xf32>
    %22 = arith.addf %20, %21 : vector<128x32xf32>
    %23 = arith.truncf %22 : vector<128x32xf32> to vector<128x32xbf16>
    %c0_9 = arith.constant 0 : index
    %c0_10 = arith.constant 0 : index
    %24 = vector.load %arg4[%c0_9, %c0_10] : memref<80x64xbf16, #tpu.memory_space<vmem>>, vector<80x64xbf16>
    %c0_11 = arith.constant 0 : index
    %c0_12 = arith.constant 0 : index
    %25 = vector.load %arg7[%c0_11, %c0_12] : memref<64x80xbf16, #tpu.memory_space<vmem>>, vector<64x80xbf16>
    %c0_13 = arith.constant 0 : index
    %c0_14 = arith.constant 0 : index
    %26 = vector.load %arg5[%c0_13, %c0_14] : memref<40x32xf32, #tpu.memory_space<vmem>>, vector<40x32xf32>
    %c0_15 = arith.constant 0 : index
    %c0_16 = arith.constant 0 : index
    %27 = vector.load %arg6[%c0_15, %c0_16] : memref<40x32xf32, #tpu.memory_space<vmem>>, vector<40x32xf32>
    %28 = vector.extract_strided_slice %23 {offsets = [0, 0], sizes = [64, 32], strides = [1, 1]} : vector<128x32xbf16> to vector<64x32xbf16>
    %cst_17 = arith.constant dense<0.000000e+00> : vector<80x32xf32>
    %29 = tpu.matmul %24, %28, %cst_17 {dimension_numbers = #tpu.dot_dimension_numbers<[1], [0], [0], [1], [0, 0, 1, 1], [], []>} : vector<80x64xbf16>, vector<64x32xbf16>, vector<80x32xf32> -> vector<80x32xf32>
    %30 = vector.extract_strided_slice %29 {offsets = [0, 0], sizes = [40, 32], strides = [1, 1]} : vector<80x32xf32> to vector<40x32xf32>
    %31 = vector.extract_strided_slice %29 {offsets = [40, 0], sizes = [40, 32], strides = [1, 1]} : vector<80x32xf32> to vector<40x32xf32>
    %32 = arith.mulf %30, %26 : vector<40x32xf32>
    %33 = arith.mulf %31, %27 : vector<40x32xf32>
    %34 = arith.subf %32, %33 : vector<40x32xf32>
    %35 = arith.mulf %30, %27 : vector<40x32xf32>
    %36 = arith.mulf %31, %26 : vector<40x32xf32>
    %37 = arith.addf %35, %36 : vector<40x32xf32>
    %38 = tpu.concatenate %34, %37 in 0 : vector<40x32xf32>, vector<40x32xf32> -> vector<80x32xf32>
    %39 = arith.truncf %38 : vector<80x32xf32> to vector<80x32xbf16>
    %cst_18 = arith.constant dense<0.000000e+00> : vector<64x32xf32>
    %40 = tpu.matmul %25, %39, %cst_18 {dimension_numbers = #tpu.dot_dimension_numbers<[1], [0], [0], [1], [0, 0, 1, 1], [], []>} : vector<64x80xbf16>, vector<80x32xbf16>, vector<64x32xf32> -> vector<64x32xf32>
    %41 = vector.extract_strided_slice %23 {offsets = [64, 0], sizes = [64, 32], strides = [1, 1]} : vector<128x32xbf16> to vector<64x32xbf16>
    %cst_19 = arith.constant dense<0.000000e+00> : vector<80x32xf32>
    %42 = tpu.matmul %24, %41, %cst_19 {dimension_numbers = #tpu.dot_dimension_numbers<[1], [0], [0], [1], [0, 0, 1, 1], [], []>} : vector<80x64xbf16>, vector<64x32xbf16>, vector<80x32xf32> -> vector<80x32xf32>
    %43 = vector.extract_strided_slice %42 {offsets = [0, 0], sizes = [40, 32], strides = [1, 1]} : vector<80x32xf32> to vector<40x32xf32>
    %44 = vector.extract_strided_slice %42 {offsets = [40, 0], sizes = [40, 32], strides = [1, 1]} : vector<80x32xf32> to vector<40x32xf32>
    %45 = arith.mulf %43, %26 : vector<40x32xf32>
    %46 = arith.mulf %44, %27 : vector<40x32xf32>
    %47 = arith.subf %45, %46 : vector<40x32xf32>
    %48 = arith.mulf %43, %27 : vector<40x32xf32>
    %49 = arith.mulf %44, %26 : vector<40x32xf32>
    %50 = arith.addf %48, %49 : vector<40x32xf32>
    %51 = tpu.concatenate %47, %50 in 0 : vector<40x32xf32>, vector<40x32xf32> -> vector<80x32xf32>
    %52 = arith.truncf %51 : vector<80x32xf32> to vector<80x32xbf16>
    %cst_20 = arith.constant dense<0.000000e+00> : vector<64x32xf32>
    %53 = tpu.matmul %25, %52, %cst_20 {dimension_numbers = #tpu.dot_dimension_numbers<[1], [0], [0], [1], [0, 0, 1, 1], [], []>} : vector<64x80xbf16>, vector<80x32xbf16>, vector<64x32xf32> -> vector<64x32xf32>
    %54 = tpu.concatenate %40, %53 in 0 : vector<64x32xf32>, vector<64x32xf32> -> vector<128x32xf32>
    %c0_21 = arith.constant 0 : index
    %c0_22 = arith.constant 0 : index
    %55 = vector.load %arg8[%c0_21, %c0_22] : memref<1x32xf32, #tpu.memory_space<vmem>>, vector<1x32xf32>
    %c0_23 = arith.constant 0 : index
    %c0_24 = arith.constant 0 : index
    %56 = vector.load %arg9[%c0_23, %c0_24] : memref<1x32xf32, #tpu.memory_space<vmem>>, vector<1x32xf32>
    %cst_25 = arith.constant dense<0.000000e+00> : vector<128xf32>
    %57 = vector.multi_reduction <add>, %54, %cst_25 [1] : vector<128x32xf32> to vector<128xf32>
    %58 = vector.shape_cast %57 : vector<128xf32> to vector<128x1xf32>
    %cst_26 = arith.constant 3.200000e+01 : f32
    %59 = vector.broadcast %cst_26 : f32 to vector<128x1xf32>
    %60 = arith.divf %58, %59 : vector<128x1xf32>
    %61 = vector.broadcast %60 : vector<128x1xf32> to vector<128x32xf32>
    %62 = arith.subf %54, %61 : vector<128x32xf32>
    %63 = arith.mulf %62, %62 : vector<128x32xf32>
    %cst_27 = arith.constant dense<0.000000e+00> : vector<128xf32>
    %64 = vector.multi_reduction <add>, %63, %cst_27 [1] : vector<128x32xf32> to vector<128xf32>
    %65 = vector.shape_cast %64 : vector<128xf32> to vector<128x1xf32>
    %cst_28 = arith.constant 3.200000e+01 : f32
    %66 = vector.broadcast %cst_28 : f32 to vector<128x1xf32>
    %67 = arith.divf %65, %66 : vector<128x1xf32>
    %cst_29 = arith.constant 9.99999974E-6 : f32
    %68 = vector.broadcast %cst_29 : f32 to vector<128x1xf32>
    %69 = arith.addf %67, %68 : vector<128x1xf32>
    %70 = math.rsqrt %69 : vector<128x1xf32>
    %71 = vector.broadcast %70 : vector<128x1xf32> to vector<128x32xf32>
    %72 = arith.mulf %62, %71 : vector<128x32xf32>
    %73 = vector.broadcast %55 : vector<1x32xf32> to vector<128x32xf32>
    %74 = arith.mulf %72, %73 : vector<128x32xf32>
    %75 = vector.broadcast %56 : vector<1x32xf32> to vector<128x32xf32>
    %76 = arith.addf %74, %75 : vector<128x32xf32>
    %77 = arith.truncf %76 : vector<128x32xf32> to vector<128x32xbf16>
    %c0_30 = arith.constant 0 : index
    %c0_31 = arith.constant 0 : index
    %78 = vector.load %arg10[%c0_30, %c0_31] : memref<32x128xbf16, #tpu.memory_space<vmem>>, vector<32x128xbf16>
    %cst_32 = arith.constant dense<0.000000e+00> : vector<128x128xf32>
    %79 = tpu.matmul %77, %78, %cst_32 {dimension_numbers = #tpu.dot_dimension_numbers<[1], [0], [0], [1], [0, 0, 1, 1], [], []>} : vector<128x32xbf16>, vector<32x128xbf16>, vector<128x128xf32> -> vector<128x128xf32>
    %c0_33 = arith.constant 0 : index
    %c0_34 = arith.constant 0 : index
    %80 = vector.load %arg11[%c0_33, %c0_34] : memref<1x128xf32, #tpu.memory_space<vmem>>, vector<1x128xf32>
    %81 = vector.broadcast %80 : vector<1x128xf32> to vector<128x128xf32>
    %82 = arith.addf %79, %81 : vector<128x128xf32>
    %cst_35 = arith.constant 5.000000e-01 : f32
    %83 = vector.broadcast %cst_35 : f32 to vector<128x128xf32>
    %84 = arith.mulf %83, %82 : vector<128x128xf32>
    %cst_36 = arith.constant 4.471500e-02 : f32
    %85 = vector.broadcast %cst_36 : f32 to vector<128x128xf32>
    %86 = arith.mulf %85, %82 : vector<128x128xf32>
    %87 = arith.mulf %86, %82 : vector<128x128xf32>
    %88 = arith.mulf %87, %82 : vector<128x128xf32>
    %89 = arith.addf %82, %88 : vector<128x128xf32>
    %cst_37 = arith.constant 0.797884583 : f32
    %90 = vector.broadcast %cst_37 : f32 to vector<128x128xf32>
    %91 = arith.mulf %90, %89 : vector<128x128xf32>
    %92 = math.tanh %91 : vector<128x128xf32>
    %cst_38 = arith.constant 1.000000e+00 : f32
    %93 = vector.broadcast %cst_38 : f32 to vector<128x128xf32>
    %94 = arith.addf %93, %92 : vector<128x128xf32>
    %95 = arith.mulf %84, %94 : vector<128x128xf32>
    %96 = arith.truncf %95 : vector<128x128xf32> to vector<128x128xbf16>
    %c0_39 = arith.constant 0 : index
    %c0_40 = arith.constant 0 : index
    %97 = vector.load %arg12[%c0_39, %c0_40] : memref<128x32xbf16, #tpu.memory_space<vmem>>, vector<128x32xbf16>
    %cst_41 = arith.constant dense<0.000000e+00> : vector<128x32xf32>
    %98 = tpu.matmul %96, %97, %cst_41 {dimension_numbers = #tpu.dot_dimension_numbers<[1], [0], [0], [1], [0, 0, 1, 1], [], []>} : vector<128x128xbf16>, vector<128x32xbf16>, vector<128x32xf32> -> vector<128x32xf32>
    %c0_42 = arith.constant 0 : index
    %c0_43 = arith.constant 0 : index
    %99 = vector.load %arg13[%c0_42, %c0_43] : memref<1x32xf32, #tpu.memory_space<vmem>>, vector<1x32xf32>
    %100 = vector.broadcast %99 : vector<1x32xf32> to vector<128x32xf32>
    %101 = arith.addf %98, %100 : vector<128x32xf32>
    %c0_44 = arith.constant 0 : index
    %c0_45 = arith.constant 0 : index
    %102 = vector.load %arg14[%c0_44, %c0_45] : memref<128x32xf32, #tpu.memory_space<vmem>>, vector<128x32xf32>
    tpu.vector_store %arg14[%c0_44, %c0_45], %101 {strides = array<i32>} : memref<128x32xf32, #tpu.memory_space<vmem>>, vector<128x32xf32>,
    return
  }
  func.func @transform_0(%arg0: i32) -> (i32, i32) {
    %c0_i32 = arith.constant 0 : i32
    %c0_i32_0 = arith.constant 0 : i32
    return %arg0, %c0_i32 : i32, i32
  }
  func.func @transform_1(%arg0: i32) -> (i32, i32) {
    %c0_i32 = arith.constant 0 : i32
    %c0_i32_0 = arith.constant 0 : i32
    %c0_i32_1 = arith.constant 0 : i32
    return %c0_i32, %c0_i32_0 : i32, i32
  }
  func.func @transform_2(%arg0: i32) -> (i32, i32) {
    %c0_i32 = arith.constant 0 : i32
    %c0_i32_0 = arith.constant 0 : i32
    %c0_i32_1 = arith.constant 0 : i32
    return %c0_i32, %c0_i32_0 : i32, i32
  }
  func.func @transform_3(%arg0: i32) -> (i32, i32) {
    %c0_i32 = arith.constant 0 : i32
    %c0_i32_0 = arith.constant 0 : i32
    %c0_i32_1 = arith.constant 0 : i32
    return %c0_i32, %c0_i32_0 : i32, i32
  }
  func.func @transform_4(%arg0: i32) -> (i32, i32) {
    %c0_i32 = arith.constant 0 : i32
    %c0_i32_0 = arith.constant 0 : i32
    %c0_i32_1 = arith.constant 0 : i32
    return %c0_i32, %c0_i32_0 : i32, i32
  }
  func.func @transform_5(%arg0: i32) -> (i32, i32) {
    %c0_i32 = arith.constant 0 : i32
    %c0_i32_0 = arith.constant 0 : i32
    %c0_i32_1 = arith.constant 0 : i32
    return %c0_i32, %c0_i32_0 : i32, i32
  }
  func.func @transform_6(%arg0: i32) -> (i32, i32) {
    %c0_i32 = arith.constant 0 : i32
    %c0_i32_0 = arith.constant 0 : i32
    %c0_i32_1 = arith.constant 0 : i32
    return %c0_i32, %c0_i32_0 : i32, i32
  }
  func.func @transform_7(%arg0: i32) -> (i32, i32) {
    %c0_i32 = arith.constant 0 : i32
    %c0_i32_0 = arith.constant 0 : i32
    %c0_i32_1 = arith.constant 0 : i32
    return %c0_i32, %c0_i32_0 : i32, i32
  }
  func.func @transform_8(%arg0: i32) -> (i32, i32) {
    %c0_i32 = arith.constant 0 : i32
    %c0_i32_0 = arith.constant 0 : i32
    %c0_i32_1 = arith.constant 0 : i32
    return %c0_i32, %c0_i32_0 : i32, i32
  }
  func.func @transform_9(%arg0: i32) -> (i32, i32) {
    %c0_i32 = arith.constant 0 : i32
    %c0_i32_0 = arith.constant 0 : i32
    %c0_i32_1 = arith.constant 0 : i32
    return %c0_i32, %c0_i32_0 : i32, i32
  }
  func.func @transform_10(%arg0: i32) -> (i32, i32) {
    %c0_i32 = arith.constant 0 : i32
    %c0_i32_0 = arith.constant 0 : i32
    %c0_i32_1 = arith.constant 0 : i32
    return %c0_i32, %c0_i32_0 : i32, i32
  }
  func.func @transform_11(%arg0: i32) -> (i32, i32) {
    %c0_i32 = arith.constant 0 : i32
    %c0_i32_0 = arith.constant 0 : i32
    %c0_i32_1 = arith.constant 0 : i32
    return %c0_i32, %c0_i32_0 : i32, i32
  }
  func.func @transform_12(%arg0: i32) -> (i32, i32) {
    %c0_i32 = arith.constant 0 : i32
    %c0_i32_0 = arith.constant 0 : i32
    %c0_i32_1 = arith.constant 0 : i32
    return %c0_i32, %c0_i32_0 : i32, i32
  }
  func.func @transform_13(%arg0: i32) -> (i32, i32) {
    %c0_i32 = arith.constant 0 : i32
    %c0_i32_0 = arith.constant 0 : i32
    return %arg0, %c0_i32 : i32, i32
  }
}

</mosaic_0001>

<llo_original>
// kernel: tpu_custom_call.1
$region0: #{tpu_custom_call.1}
  #allocation0 [shape = 'u32[]', space=smem, size = 0x4, offset = 0x4, fixed_abs, tag = 'smem constant byte address 0x4 - core index']
  #allocation1 [shape = 'u32[144,128]{1,0:T(1,128)}', space=vmem, size = 0x12000, scoped, tag = 'internal scratch']
  %s0 = inlined_call_operand.vmem [shape: f32[128,32], index: 0, kind: input, shape index: {}]
  %s1 = inlined_call_operand.vmem [shape: f32[1,32], index: 1, kind: input, shape index: {}]
  %s2 = inlined_call_operand.vmem [shape: f32[1,32], index: 2, kind: input, shape index: {}]
  %s3 = inlined_call_operand.vmem [shape: bf16[80,64], index: 3, kind: input, shape index: {}]
  %s4 = inlined_call_operand.vmem [shape: f32[40,32], index: 4, kind: input, shape index: {}]
  %s5 = inlined_call_operand.vmem [shape: f32[40,32], index: 5, kind: input, shape index: {}]
  %s6 = inlined_call_operand.vmem [shape: bf16[64,80], index: 6, kind: input, shape index: {}]
  %s7 = inlined_call_operand.vmem [shape: f32[1,32], index: 7, kind: input, shape index: {}]
  %s8 = inlined_call_operand.vmem [shape: f32[1,32], index: 8, kind: input, shape index: {}]
  %s9 = inlined_call_operand.vmem [shape: bf16[32,128], index: 9, kind: input, shape index: {}]
  %s10 = inlined_call_operand.vmem [shape: f32[1,128], index: 10, kind: input, shape index: {}]
  %s11 = inlined_call_operand.vmem [shape: bf16[128,32], index: 11, kind: input, shape index: {}]
  %s12 = inlined_call_operand.vmem [shape: f32[1,32], index: 12, kind: input, shape index: {}]
  %s13 = inlined_call_operand.vmem [shape: f32[128,32], index: 13, kind: output, shape index: {}]
  %s14 = sld [smem:[#allocation0]]
  $region62: #{tpu_custom_call.1} parent=0
    _
  %s16 = ssub.s32 1, %s14
  %s17 = scalar_select 0, %s16, %s14
  // Predicated region
  $region2: #{tpu_custom_call.1} parent=0 // pred_check
    _
  $region3: #{tpu_custom_call.1} parent=0 // pred_check_branch
    %19 = sbr.rel (0) target = $region5
  $region4: #{tpu_custom_call.1} parent=0 // pred_region
    _
  $region5: #{tpu_custom_call.1} parent=0 // pred_fallthru
    _
  // Predicated region
  $region6: #{tpu_custom_call.1} parent=0 // pred_check
    _
  $region7: #{tpu_custom_call.1} parent=0 // pred_check_branch
    %21 = sbr.rel (0) target = $region9
  $region8: #{tpu_custom_call.1} parent=0 // pred_region
    _
  $region9: #{tpu_custom_call.1} parent=0 // pred_fallthru
    _
  // Predicated region
  $region10: #{tpu_custom_call.1} parent=0 // pred_check
    _
  $region11: #{tpu_custom_call.1} parent=0 // pred_check_branch
    %23 = sbr.rel (0) target = $region13
  $region12: #{tpu_custom_call.1} parent=0 // pred_region
    _
  $region13: #{tpu_custom_call.1} parent=0 // pred_fallthru
    _
  // Predicated region
  $region14: #{tpu_custom_call.1} parent=0 // pred_check
    _
  $region15: #{tpu_custom_call.1} parent=0 // pred_check_branch
    %25 = sbr.rel (0) target = $region17
  $region16: #{tpu_custom_call.1} parent=0 // pred_region
    _
  $region17: #{tpu_custom_call.1} parent=0 // pred_fallthru
    _
  // Predicated region
  $region18: #{tpu_custom_call.1} parent=0 // pred_check
    _
  $region19: #{tpu_custom_call.1} parent=0 // pred_check_branch
    %27 = sbr.rel (0) target = $region21
  $region20: #{tpu_custom_call.1} parent=0 // pred_region
    _
  $region21: #{tpu_custom_call.1} parent=0 // pred_fallthru
    _
  // Predicated region
  $region22: #{tpu_custom_call.1} parent=0 // pred_check
    _
  $region23: #{tpu_custom_call.1} parent=0 // pred_check_branch
    %29 = sbr.rel (0) target = $region25
  $region24: #{tpu_custom_call.1} parent=0 // pred_region
    _
  $region25: #{tpu_custom_call.1} parent=0 // pred_fallthru
    _
  // Predicated region
  $region26: #{tpu_custom_call.1} parent=0 // pred_check
    _
  $region27: #{tpu_custom_call.1} parent=0 // pred_check_branch
    %31 = sbr.rel (0) target = $region29
  $region28: #{tpu_custom_call.1} parent=0 // pred_region
    _
  $region29: #{tpu_custom_call.1} parent=0 // pred_fallthru
    _
  // Predicated region
  $region30: #{tpu_custom_call.1} parent=0 // pred_check
    _
  $region31: #{tpu_custom_call.1} parent=0 // pred_check_branch
    %33 = sbr.rel (0) target = $region33
  $region32: #{tpu_custom_call.1} parent=0 // pred_region
    _
  $region33: #{tpu_custom_call.1} parent=0 // pred_fallthru
    _
  // Predicated region
  $region34: #{tpu_custom_call.1} parent=0 // pred_check
    _
  $region35: #{tpu_custom_call.1} parent=0 // pred_check_branch
    %35 = sbr.rel (0) target = $region37
  $region36: #{tpu_custom_call.1} parent=0 // pred_region
    _
  $region37: #{tpu_custom_call.1} parent=0 // pred_fallthru
    _
  // Predicated region
  $region38: #{tpu_custom_call.1} parent=0 // pred_check
    _
  $region39: #{tpu_custom_call.1} parent=0 // pred_check_branch
    %37 = sbr.rel (0) target = $region41
  $region40: #{tpu_custom_call.1} parent=0 // pred_region
    _
  $region41: #{tpu_custom_call.1} parent=0 // pred_fallthru
    _
  // Predicated region
  $region42: #{tpu_custom_call.1} parent=0 // pred_check
    _
  $region43: #{tpu_custom_call.1} parent=0 // pred_check_branch
    %39 = sbr.rel (0) target = $region45
  $region44: #{tpu_custom_call.1} parent=0 // pred_region
    _
  $region45: #{tpu_custom_call.1} parent=0 // pred_fallthru
    _
  // Predicated region
  $region46: #{tpu_custom_call.1} parent=0 // pred_check
    _
  $region47: #{tpu_custom_call.1} parent=0 // pred_check_branch
    %41 = sbr.rel (0) target = $region49
  $region48: #{tpu_custom_call.1} parent=0 // pred_region
    _
  $region49: #{tpu_custom_call.1} parent=0 // pred_fallthru
    _
  // Predicated region
  $region50: #{tpu_custom_call.1} parent=0 // pred_check
    _
  $region51: #{tpu_custom_call.1} parent=0 // pred_check_branch
    %43 = sbr.rel (0) target = $region53
  $region52: #{tpu_custom_call.1} parent=0 // pred_region
    _
  $region53: #{tpu_custom_call.1} parent=0 // pred_fallthru
    _
  %v45 = vld [vmem:[%s0] sm:$0xff]
  %v46 = vld [vmem:[%s0 + $0x8] sm:$0xff]
  %v47 = vld [vmem:[%s0 + $0x10] sm:$0xff]
  %v48 = vld [vmem:[%s0 + $0x18] sm:$0xff]
  %v49 = vld [vmem:[%s0 + $0x20] sm:$0xff]
  %v50 = vld [vmem:[%s0 + $0x28] sm:$0xff]
  %v51 = vld [vmem:[%s0 + $0x30] sm:$0xff]
  %v52 = vld [vmem:[%s0 + $0x38] sm:$0xff]
  %v53 = vld [vmem:[%s0 + $0x40] sm:$0xff]
  %v54 = vld [vmem:[%s0 + $0x48] sm:$0xff]
  %v55 = vld [vmem:[%s0 + $0x50] sm:$0xff]
  %v56 = vld [vmem:[%s0 + $0x58] sm:$0xff]
  %v57 = vld [vmem:[%s0 + $0x60] sm:$0xff]
  %v58 = vld [vmem:[%s0 + $0x68] sm:$0xff]
  %v59 = vld [vmem:[%s0 + $0x70] sm:$0xff]
  %v60 = vld [vmem:[%s0 + $0x78] sm:$0xff]
  %v61 = vld [vmem:[%s1] sm:$0x1]
  %v62 = vld [vmem:[%s2] sm:$0x1]
  %vm63 = vcmask 261120
  %v64 = vsel %vm63, %v45, 0.0
  %65 = vadd.xlane.f32.xlu0 %v64
  %v66 = vpop.xlane.xlu0 %65
  %v67 = vsel %vm63, %v46, 0.0
  %68 = vadd.xlane.f32.xlu0 %v67
  %v69 = vpop.xlane.xlu0 %68
  %v70 = vsel %vm63, %v47, 0.0
  %71 = vadd.xlane.f32.xlu0 %v70
  %v72 = vpop.xlane.xlu0 %71
  %v73 = vsel %vm63, %v48, 0.0
  %74 = vadd.xlane.f32.xlu0 %v73
  %v75 = vpop.xlane.xlu0 %74
  %v76 = vsel %vm63, %v49, 0.0
  %77 = vadd.xlane.f32.xlu0 %v76
  %v78 = vpop.xlane.xlu0 %77
  %v79 = vsel %vm63, %v50, 0.0
  %80 = vadd.xlane.f32.xlu0 %v79
  %v81 = vpop.xlane.xlu0 %80
  %v82 = vsel %vm63, %v51, 0.0
  %83 = vadd.xlane.f32.xlu0 %v82
  %v84 = vpop.xlane.xlu0 %83
  %v85 = vsel %vm63, %v52, 0.0
  %86 = vadd.xlane.f32.xlu0 %v85
  %v87 = vpop.xlane.xlu0 %86
  %v88 = vsel %vm63, %v53, 0.0
  %89 = vadd.xlane.f32.xlu0 %v88
  %v90 = vpop.xlane.xlu0 %89
  %v91 = vsel %vm63, %v54, 0.0
  %92 = vadd.xlane.f32.xlu0 %v91
  %v93 = vpop.xlane.xlu0 %92
  %v94 = vsel %vm63, %v55, 0.0
  %95 = vadd.xlane.f32.xlu0 %v94
  %v96 = vpop.xlane.xlu0 %95
  %v97 = vsel %vm63, %v56, 0.0
  %98 = vadd.xlane.f32.xlu0 %v97
  %v99 = vpop.xlane.xlu0 %98
  %v100 = vsel %vm63, %v57, 0.0
  %101 = vadd.xlane.f32.xlu0 %v100
  %v102 = vpop.xlane.xlu0 %101
  %v103 = vsel %vm63, %v58, 0.0
  %104 = vadd.xlane.f32.xlu0 %v103
  %v105 = vpop.xlane.xlu0 %104
  %v106 = vsel %vm63, %v59, 0.0
  %107 = vadd.xlane.f32.xlu0 %v106
  %v108 = vpop.xlane.xlu0 %107
  %v109 = vsel %vm63, %v60, 0.0
  %110 = vadd.xlane.f32.xlu0 %v109
  %v111 = vpop.xlane.xlu0 %110
  %v112 = vrcp.pop 32.0
  %v113 = vmul.f32 %v66, %v112
  %v114 = vmul.f32 %v69, %v112
  %v115 = vmul.f32 %v72, %v112
  %v116 = vmul.f32 %v75, %v112
  %v117 = vmul.f32 %v78, %v112
  %v118 = vmul.f32 %v81, %v112
  %v119 = vmul.f32 %v84, %v112
  %v120 = vmul.f32 %v87, %v112
  %v121 = vmul.f32 %v90, %v112
  %v122 = vmul.f32 %v93, %v112
  %v123 = vmul.f32 %v96, %v112
  %v124 = vmul.f32 %v99, %v112
  %v125 = vmul.f32 %v102, %v112
  %v126 = vmul.f32 %v105, %v112
  %v127 = vmul.f32 %v108, %v112
  %v128 = vmul.f32 %v111, %v112
  %v129 = vsub.f32 %v45, %v113
  %v130 = vsub.f32 %v46, %v114
  %v131 = vsub.f32 %v47, %v115
  %v132 = vsub.f32 %v48, %v116
  %v133 = vsub.f32 %v49, %v117
  %v134 = vsub.f32 %v50, %v118
  %v135 = vsub.f32 %v51, %v119
  %v136 = vsub.f32 %v52, %v120
  %v137 = vsub.f32 %v53, %v121
  %v138 = vsub.f32 %v54, %v122
  %v139 = vsub.f32 %v55, %v123
  %v140 = vsub.f32 %v56, %v124
  %v141 = vsub.f32 %v57, %v125
  %v142 = vsub.f32 %v58, %v126
  %v143 = vsub.f32 %v59, %v127
  %v144 = vsub.f32 %v60, %v128
  %v145 = vmul.f32 %v129, %v129
  %v146 = vmul.f32 %v130, %v130
  %v147 = vmul.f32 %v131, %v131
  %v148 = vmul.f32 %v132, %v132
  %v149 = vmul.f32 %v133, %v133
  %v150 = vmul.f32 %v134, %v134
  %v151 = vmul.f32 %v135, %v135
  %v152 = vmul.f32 %v136, %v136
  %v153 = vmul.f32 %v137, %v137
  %v154 = vmul.f32 %v138, %v138
  %v155 = vmul.f32 %v139, %v139
  %v156 = vmul.f32 %v140, %v140
  %v157 = vmul.f32 %v141, %v141
  %v158 = vmul.f32 %v142, %v142
  %v159 = vmul.f32 %v143, %v143
  %v160 = vmul.f32 %v144, %v144
  %v161 = vsel %vm63, %v145, 0.0
  %162 = vadd.xlane.f32.xlu0 %v161
  %v163 = vpop.xlane.xlu0 %162
  %v164 = vsel %vm63, %v146, 0.0
  %165 = vadd.xlane.f32.xlu0 %v164
  %v166 = vpop.xlane.xlu0 %165
  %v167 = vsel %vm63, %v147, 0.0
  %168 = vadd.xlane.f32.xlu0 %v167
  %v169 = vpop.xlane.xlu0 %168
  %v170 = vsel %vm63, %v148, 0.0
  %171 = vadd.xlane.f32.xlu0 %v170
  %v172 = vpop.xlane.xlu0 %171
  %v173 = vsel %vm63, %v149, 0.0
  %174 = vadd.xlane.f32.xlu0 %v173
  %v175 = vpop.xlane.xlu0 %174
  %v176 = vsel %vm63, %v150, 0.0
  %177 = vadd.xlane.f32.xlu0 %v176
  %v178 = vpop.xlane.xlu0 %177
  %v179 = vsel %vm63, %v151, 0.0
  %180 = vadd.xlane.f32.xlu0 %v179
  %v181 = vpop.xlane.xlu0 %180
  %v182 = vsel %vm63, %v152, 0.0
  %183 = vadd.xlane.f32.xlu0 %v182
  %v184 = vpop.xlane.xlu0 %183
  %v185 = vsel %vm63, %v153, 0.0
  %186 = vadd.xlane.f32.xlu0 %v185
  %v187 = vpop.xlane.xlu0 %186
  %v188 = vsel %vm63, %v154, 0.0
  %189 = vadd.xlane.f32.xlu0 %v188
  %v190 = vpop.xlane.xlu0 %189
  %v191 = vsel %vm63, %v155, 0.0
  %192 = vadd.xlane.f32.xlu0 %v191
  %v193 = vpop.xlane.xlu0 %192
  %v194 = vsel %vm63, %v156, 0.0
  %195 = vadd.xlane.f32.xlu0 %v194
  %v196 = vpop.xlane.xlu0 %195
  %v197 = vsel %vm63, %v157, 0.0
  %198 = vadd.xlane.f32.xlu0 %v197
  %v199 = vpop.xlane.xlu0 %198
  %v200 = vsel %vm63, %v158, 0.0
  %201 = vadd.xlane.f32.xlu0 %v200
  %v202 = vpop.xlane.xlu0 %201
  %v203 = vsel %vm63, %v159, 0.0
  %204 = vadd.xlane.f32.xlu0 %v203
  %v205 = vpop.xlane.xlu0 %204
  %v206 = vsel %vm63, %v160, 0.0
  %207 = vadd.xlane.f32.xlu0 %v206
  %v208 = vpop.xlane.xlu0 %207
  %v209 = vmul.f32 %v163, %v112
  %v210 = vmul.f32 %v166, %v112
  %v211 = vmul.f32 %v169, %v112
  %v212 = vmul.f32 %v172, %v112
  %v213 = vmul.f32 %v175, %v112
  %v214 = vmul.f32 %v178, %v112
  %v215 = vmul.f32 %v181, %v112
  %v216 = vmul.f32 %v184, %v112
  %v217 = vmul.f32 %v187, %v112
  %v218 = vmul.f32 %v190, %v112
  %v219 = vmul.f32 %v193, %v112
  %v220 = vmul.f32 %v196, %v112
  %v221 = vmul.f32 %v199, %v112
  %v222 = vmul.f32 %v202, %v112
  %v223 = vmul.f32 %v205, %v112
  %v224 = vmul.f32 %v208, %v112
  %v225 = vadd.f32 %v209, 1e-05
  %v226 = vadd.f32 %v210, 1e-05
  %v227 = vadd.f32 %v211, 1e-05
  %v228 = vadd.f32 %v212, 1e-05
  %v229 = vadd.f32 %v213, 1e-05
  %v230 = vadd.f32 %v214, 1e-05
  %v231 = vadd.f32 %v215, 1e-05
  %v232 = vadd.f32 %v216, 1e-05
  %v233 = vadd.f32 %v217, 1e-05
  %v234 = vadd.f32 %v218, 1e-05
  %v235 = vadd.f32 %v219, 1e-05
  %v236 = vadd.f32 %v220, 1e-05
  %v237 = vadd.f32 %v221, 1e-05
  %v238 = vadd.f32 %v222, 1e-05
  %v239 = vadd.f32 %v223, 1e-05
  %v240 = vadd.f32 %v224, 1e-05
  %v241 = vrsqrt.pop %v225
  %v242 = vrsqrt.pop %v226
  %v243 = vrsqrt.pop %v227
  %v244 = vrsqrt.pop %v228
  %v245 = vrsqrt.pop %v229
  %v246 = vrsqrt.pop %v230
  %v247 = vrsqrt.pop %v231
  %v248 = vrsqrt.pop %v232
  %v249 = vrsqrt.pop %v233
  %v250 = vrsqrt.pop %v234
  %v251 = vrsqrt.pop %v235
  %v252 = vrsqrt.pop %v236
  %v253 = vrsqrt.pop %v237
  %v254 = vrsqrt.pop %v238
  %v255 = vrsqrt.pop %v239
  %v256 = vrsqrt.pop %v240
  %v257 = vmul.f32 %v129, %v241
  %v258 = vmul.f32 %v130, %v242
  %v259 = vmul.f32 %v131, %v243
  %v260 = vmul.f32 %v132, %v244
  %v261 = vmul.f32 %v133, %v245
  %v262 = vmul.f32 %v134, %v246
  %v263 = vmul.f32 %v135, %v247
  %v264 = vmul.f32 %v136, %v248
  %v265 = vmul.f32 %v137, %v249
  %v266 = vmul.f32 %v138, %v250
  %v267 = vmul.f32 %v139, %v251
  %v268 = vmul.f32 %v140, %v252
  %v269 = vmul.f32 %v141, %v253
  %v270 = vmul.f32 %v142, %v254
  %v271 = vmul.f32 %v143, %v255
  %v272 = vmul.f32 %v144, %v256
  %v274 = vlaneseq
  %v275 = vshrl.u32 %v274, 7
  %v276 = vsub.s32 0, %v275
  %v277 = vrot.slane %v61, %v276
  %v279 = vmul.f32 %v257, %v277
  %v280 = vmul.f32 %v258, %v277
  %v281 = vmul.f32 %v259, %v277
  %v282 = vmul.f32 %v260, %v277
  %v283 = vmul.f32 %v261, %v277
  %v284 = vmul.f32 %v262, %v277
  %v285 = vmul.f32 %v263, %v277
  %v286 = vmul.f32 %v264, %v277
  %v287 = vmul.f32 %v265, %v277
  %v288 = vmul.f32 %v266, %v277
  %v289 = vmul.f32 %v267, %v277
  %v290 = vmul.f32 %v268, %v277
  %v291 = vmul.f32 %v269, %v277
  %v292 = vmul.f32 %v270, %v277
  %v293 = vmul.f32 %v271, %v277
  %v294 = vmul.f32 %v272, %v277
  %v296 = vlaneseq
  %v297 = vshrl.u32 %v296, 7
  %v298 = vsub.s32 0, %v297
  %v299 = vrot.slane %v62, %v298
  %v301 = vadd.f32 %v279, %v299
  %v302 = vadd.f32 %v280, %v299
  %v303 = vadd.f32 %v281, %v299
  %v304 = vadd.f32 %v282, %v299
  %v305 = vadd.f32 %v283, %v299
  %v306 = vadd.f32 %v284, %v299
  %v307 = vadd.f32 %v285, %v299
  %v308 = vadd.f32 %v286, %v299
  %v309 = vadd.f32 %v287, %v299
  %v310 = vadd.f32 %v288, %v299
  %v311 = vadd.f32 %v289, %v299
  %v312 = vadd.f32 %v290, %v299
  %v313 = vadd.f32 %v291, %v299
  %v314 = vadd.f32 %v292, %v299
  %v315 = vadd.f32 %v293, %v299
  %v316 = vadd.f32 %v294, %v299
  %v317 = vpack.c.bf16 %v302, %v301
  %v318 = vpack.c.bf16 %v304, %v303
  %v319 = vpack.c.bf16 %v306, %v305
  %v320 = vpack.c.bf16 %v308, %v307
  %v321 = vpack.c.bf16 %v310, %v309
  %v322 = vpack.c.bf16 %v312, %v311
  %v323 = vpack.c.bf16 %v314, %v313
  %v324 = vpack.c.bf16 %v316, %v315
  %v325 = vld [vmem:[%s3] sm:$0xf]
  %v326 = vld [vmem:[%s3 + $0x4] sm:$0xf]
  %v327 = vld [vmem:[%s3 + $0x8] sm:$0xf]
  %v328 = vld [vmem:[%s3 + $0xc] sm:$0xf]
  %v329 = vld [vmem:[%s3 + $0x10] sm:$0xf]
  %v330 = vld [vmem:[%s3 + $0x14] sm:$0xf]
  %v331 = vld [vmem:[%s3 + $0x18] sm:$0xf]
  %v332 = vld [vmem:[%s3 + $0x1c] sm:$0xf]
  %v333 = vld [vmem:[%s3 + $0x20] sm:$0xf]
  %v334 = vld [vmem:[%s3 + $0x24] sm:$0xf]
  %v335 = vld [vmem:[%s6] sm:$0xf]
  %v336 = vld [vmem:[%s6 + $0x4] sm:$0xf]
  %v337 = vld [vmem:[%s6 + $0x8] sm:$0xf]
  %v338 = vld [vmem:[%s6 + $0xc] sm:$0xf]
  %v339 = vld [vmem:[%s6 + $0x10] sm:$0xf]
  %v340 = vld [vmem:[%s6 + $0x14] sm:$0xf]
  %v341 = vld [vmem:[%s6 + $0x18] sm:$0xf]
  %v342 = vld [vmem:[%s6 + $0x1c] sm:$0xf]
  %v343 = vld [vmem:[%s4] sm:$0xff]
  %v344 = vld [vmem:[%s4 + $0x8] sm:$0xff]
  %v345 = vld [vmem:[%s4 + $0x10] sm:$0xff]
  %v346 = vld [vmem:[%s4 + $0x18] sm:$0xff]
  %v347 = vld [vmem:[%s4 + $0x20] sm:$0xff]
  %v348 = vld [vmem:[%s5] sm:$0xff]
  %v349 = vld [vmem:[%s5 + $0x8] sm:$0xff]
  %v350 = vld [vmem:[%s5 + $0x10] sm:$0xff]
  %v351 = vld [vmem:[%s5 + $0x18] sm:$0xff]
  %v352 = vld [vmem:[%s5 + $0x20] sm:$0xff]
  %v363 = vunpack.c.l.b16 %v325
  %v364 = vunpack.c.l.b16 %v326
  %v365 = vunpack.c.l.b16 %v327
  %v366 = vunpack.c.l.b16 %v328
  %v367 = vunpack.c.l.b16 %v329
  %v368 = vunpack.c.l.b16 %v330
  %v369 = vunpack.c.l.b16 %v331
  %v370 = vunpack.c.l.b16 %v332
  %v371 = vunpack.c.l.b16 %v333
  %v372 = vunpack.c.l.b16 %v334
  %v373 = vpack.c.b16 %v364, %v363
  %v374 = vpack.c.b16 %v366, %v365
  %v375 = vpack.c.b16 %v368, %v367
  %v376 = vpack.c.b16 %v370, %v369
  %v377 = vpack.c.b16 %v372, %v371
  %vm378 = vcmask 523264
  %v380 = vsel %vm378, %v373, 0
  %v383 = vsel %vm378, %v374, 0
  %v386 = vsel %vm378, %v375, 0
  %v389 = vsel %vm378, %v376, 0
  %v392 = vsel %vm378, %v377, 0
  %394 = vmatprep.subr.bf16.mxu0 0
  %395 = vmatpush1.bf16.msra.mxu0 %v317
  %396 = vmatprep.subr.bf16.mxu0 0
  %397 = vmatpush1.bf16.msra.mxu0 %v318
  %398 = vmatprep.subr.bf16.mxu0 0
  %399 = vmatpush1.bf16.msra.mxu0 %v319
  %400 = vmatprep.subr.bf16.mxu0 0
  %401 = vmatpush1.bf16.msra.mxu0 %v320
  %402 = vmatprep.subr.bf16.mxu0 0
  %403 = vmatpush1.bf16.msra.mxu0 0
  %404 = vmatprep.subr.bf16.mxu0 0
  %405 = vmatpush1.bf16.msra.mxu0 0
  %406 = vmatprep.subr.bf16.mxu0 0
  %407 = vmatpush1.bf16.msra.mxu0 0
  %408 = vmatprep.subr.bf16.mxu0 0
  %409 = vmatpush1.bf16.msra.mxu0 0
  %410 = vmatprep.subr.bf16.mxu0 0
  %411 = vmatpush1.bf16.msra.mxu0 0
  %412 = vmatprep.subr.bf16.mxu0 0
  %413 = vmatpush1.bf16.msra.mxu0 0
  %414 = vmatprep.subr.bf16.mxu0 0
  %415 = vmatpush1.bf16.msra.mxu0 0
  %416 = vmatprep.subr.bf16.mxu0 0
  %417 = vmatpush1.bf16.msra.mxu0 0
  %418 = vmatprep.subr.bf16.mxu0 0
  %419 = vmatpush1.bf16.msra.mxu0 0
  %420 = vmatprep.subr.bf16.mxu0 0
  %421 = vmatpush1.bf16.msra.mxu0 0
  %422 = vmatprep.subr.bf16.mxu0 0
  %423 = vmatpush1.bf16.msra.mxu0 0
  %424 = vmatprep.subr.bf16.mxu0 0
  %425 = vmatpush1.bf16.msra.mxu0 0
  %426 = vmatprep.mubr.bf16.mxu0 0
  %427 = vmatmul.mubr.bf16.gmra.mrb[0].mxu0 %v380
  %v428 = vpop.f32.mrb[0].mxu0
  %v429 = vadd.f32 0.0, %v428
  %v430 = vpop.f32.mrb[0].mxu0
  %v431 = vpop.f32.mrb[0].mxu0
  %v432 = vadd.f32 0.0, %v431
  %v433 = vpop.f32.mrb[0].mxu0
  %434 = vmatprep.mubr.bf16.mxu0 0
  %435 = vmatmul.mubr.bf16.gmra.mrb[0].mxu0 %v383
  %v436 = vpop.f32.mrb[0].mxu0
  %v437 = vadd.f32 0.0, %v436
  %v438 = vpop.f32.mrb[0].mxu0
  %v439 = vpop.f32.mrb[0].mxu0
  %v440 = vadd.f32 0.0, %v439
  %v441 = vpop.f32.mrb[0].mxu0
  %442 = vmatprep.mubr.bf16.mxu0 0
  %443 = vmatmul.mubr.bf16.gmra.mrb[0].mxu0 %v386
  %v444 = vpop.f32.mrb[0].mxu0
  %v445 = vadd.f32 0.0, %v444
  %v446 = vpop.f32.mrb[0].mxu0
  %v447 = vpop.f32.mrb[0].mxu0
  %v448 = vadd.f32 0.0, %v447
  %v449 = vpop.f32.mrb[0].mxu0
  %450 = vmatprep.mubr.bf16.mxu0 0
  %451 = vmatmul.mubr.bf16.gmra.mrb[0].mxu0 %v389
  %v452 = vpop.f32.mrb[0].mxu0
  %v453 = vadd.f32 0.0, %v452
  %v454 = vpop.f32.mrb[0].mxu0
  %v455 = vpop.f32.mrb[0].mxu0
  %v456 = vadd.f32 0.0, %v455
  %v457 = vpop.f32.mrb[0].mxu0
  %458 = vmatprep.mubr.bf16.mxu0 0
  %459 = vmatmul.mubr.bf16.gmra.mrb[0].mxu0 %v392
  %v460 = vpop.f32.mrb[0].mxu0
  %v461 = vadd.f32 0.0, %v460
  %v462 = vpop.f32.mrb[0].mxu0
  %v463 = vpop.f32.mrb[0].mxu0
  %v464 = vadd.f32 0.0, %v463
  %v465 = vpop.f32.mrb[0].mxu0
  %466 = vdwg.mxu0
  %v467 = vmul.f32 %v429, %v343
  %v468 = vmul.f32 %v432, %v344
  %v469 = vmul.f32 %v437, %v345
  %v470 = vmul.f32 %v440, %v346
  %v471 = vmul.f32 %v445, %v347
  %v472 = vmul.f32 %v448, %v348
  %v473 = vmul.f32 %v453, %v349
  %v474 = vmul.f32 %v456, %v350
  %v475 = vmul.f32 %v461, %v351
  %v476 = vmul.f32 %v464, %v352
  %v477 = vsub.f32 %v467, %v472
  %v478 = vsub.f32 %v468, %v473
  %v479 = vsub.f32 %v469, %v474
  %v480 = vsub.f32 %v470, %v475
  %v481 = vsub.f32 %v471, %v476
  %v482 = vmul.f32 %v429, %v348
  %v483 = vmul.f32 %v432, %v349
  %v484 = vmul.f32 %v437, %v350
  %v485 = vmul.f32 %v440, %v351
  %v486 = vmul.f32 %v445, %v352
  %v487 = vmul.f32 %v448, %v343
  %v488 = vmul.f32 %v453, %v344
  %v489 = vmul.f32 %v456, %v345
  %v490 = vmul.f32 %v461, %v346
  %v491 = vmul.f32 %v464, %v347
  %v492 = vadd.f32 %v482, %v487
  %v493 = vadd.f32 %v483, %v488
  %v494 = vadd.f32 %v484, %v489
  %v495 = vadd.f32 %v485, %v490
  %v496 = vadd.f32 %v486, %v491
  %v497 = vpack.c.bf16 %v478, %v477
  %v498 = vpack.c.bf16 %v480, %v479
  %v499 = vpack.c.bf16 %v492, %v481
  %v500 = vpack.c.bf16 %v494, %v493
  %v501 = vpack.c.bf16 %v496, %v495
  %v510 = vunpack.c.l.b16 %v335
  %v511 = vunpack.c.l.b16 %v336
  %v512 = vunpack.c.l.b16 %v337
  %v513 = vunpack.c.l.b16 %v338
  %v514 = vunpack.c.l.b16 %v339
  %v515 = vunpack.c.l.b16 %v340
  %v516 = vunpack.c.l.b16 %v341
  %v517 = vunpack.c.l.b16 %v342
  %v518 = vpack.c.b16 %v511, %v510
  %v519 = vpack.c.b16 %v513, %v512
  %v520 = vpack.c.b16 %v515, %v514
  %v521 = vpack.c.b16 %v517, %v516
  %vm522 = vcmask 654336
  %v524 = vsel %vm522, %v518, 0
  %v527 = vsel %vm522, %v519, 0
  %v530 = vsel %vm522, %v520, 0
  %v533 = vsel %vm522, %v521, 0
  %535 = vmatprep.subr.bf16.mxu0 0
  %536 = vmatpush1.bf16.msra.mxu0 %v497
  %537 = vmatprep.subr.bf16.mxu0 0
  %538 = vmatpush1.bf16.msra.mxu0 %v498
  %539 = vmatprep.subr.bf16.mxu0 0
  %540 = vmatpush1.bf16.msra.mxu0 %v499
  %541 = vmatprep.subr.bf16.mxu0 0
  %542 = vmatpush1.bf16.msra.mxu0 %v500
  %543 = vmatprep.subr.bf16.mxu0 0
  %544 = vmatpush1.bf16.msra.mxu0 %v501
  %545 = vmatprep.subr.bf16.mxu0 0
  %546 = vmatpush1.bf16.msra.mxu0 0
  %547 = vmatprep.subr.bf16.mxu0 0
  %548 = vmatpush1.bf16.msra.mxu0 0
  %549 = vmatprep.subr.bf16.mxu0 0
  %550 = vmatpush1.bf16.msra.mxu0 0
  %551 = vmatprep.subr.bf16.mxu0 0
  %552 = vmatpush1.bf16.msra.mxu0 0
  %553 = vmatprep.subr.bf16.mxu0 0
  %554 = vmatpush1.bf16.msra.mxu0 0
  %555 = vmatprep.subr.bf16.mxu0 0
  %556 = vmatpush1.bf16.msra.mxu0 0
  %557 = vmatprep.subr.bf16.mxu0 0
  %558 = vmatpush1.bf16.msra.mxu0 0
  %559 = vmatprep.subr.bf16.mxu0 0
  %560 = vmatpush1.bf16.msra.mxu0 0
  %561 = vmatprep.subr.bf16.mxu0 0
  %562 = vmatpush1.bf16.msra.mxu0 0
  %563 = vmatprep.subr.bf16.mxu0 0
  %564 = vmatpush1.bf16.msra.mxu0 0
  %565 = vmatprep.subr.bf16.mxu0 0
  %566 = vmatpush1.bf16.msra.mxu0 0
  %567 = vmatprep.mubr.bf16.mxu0 0
  %568 = vmatmul.mubr.bf16.gmra.mrb[0].mxu0 %v524
  %v569 = vpop.f32.mrb[0].mxu0
  %v570 = vadd.f32 0.0, %v569
  %v571 = vpop.f32.mrb[0].mxu0
  %v572 = vpop.f32.mrb[0].mxu0
  %v573 = vadd.f32 0.0, %v572
  %v574 = vpop.f32.mrb[0].mxu0
  %575 = vmatprep.mubr.bf16.mxu0 0
  %576 = vmatmul.mubr.bf16.gmra.mrb[0].mxu0 %v527
  %v577 = vpop.f32.mrb[0].mxu0
  %v578 = vadd.f32 0.0, %v577
  %v579 = vpop.f32.mrb[0].mxu0
  %v580 = vpop.f32.mrb[0].mxu0
  %v581 = vadd.f32 0.0, %v580
  %v582 = vpop.f32.mrb[0].mxu0
  %583 = vmatprep.mubr.bf16.mxu0 0
  %584 = vmatmul.mubr.bf16.gmra.mrb[0].mxu0 %v530
  %v585 = vpop.f32.mrb[0].mxu0
  %v586 = vadd.f32 0.0, %v585
  %v587 = vpop.f32.mrb[0].mxu0
  %v588 = vpop.f32.mrb[0].mxu0
  %v589 = vadd.f32 0.0, %v588
  %v590 = vpop.f32.mrb[0].mxu0
  %591 = vmatprep.mubr.bf16.mxu0 0
  %592 = vmatmul.mubr.bf16.gmra.mrb[0].mxu0 %v533
  %v593 = vpop.f32.mrb[0].mxu0
  %v594 = vadd.f32 0.0, %v593
  %v595 = vpop.f32.mrb[0].mxu0
  %v596 = vpop.f32.mrb[0].mxu0
  %v597 = vadd.f32 0.0, %v596
  %v598 = vpop.f32.mrb[0].mxu0
  %599 = vdwg.mxu0
  %600 = vmatprep.subr.bf16.mxu0 0
  %601 = vmatpush1.bf16.msra.mxu0 %v321
  %602 = vmatprep.subr.bf16.mxu0 0
  %603 = vmatpush1.bf16.msra.mxu0 %v322
  %604 = vmatprep.subr.bf16.mxu0 0
  %605 = vmatpush1.bf16.msra.mxu0 %v323
  %606 = vmatprep.subr.bf16.mxu0 0
  %607 = vmatpush1.bf16.msra.mxu0 %v324
  %608 = vmatprep.subr.bf16.mxu0 0
  %609 = vmatpush1.bf16.msra.mxu0 0
  %610 = vmatprep.subr.bf16.mxu0 0
  %611 = vmatpush1.bf16.msra.mxu0 0
  %612 = vmatprep.subr.bf16.mxu0 0
  %613 = vmatpush1.bf16.msra.mxu0 0
  %614 = vmatprep.subr.bf16.mxu0 0
  %615 = vmatpush1.bf16.msra.mxu0 0
  %616 = vmatprep.subr.bf16.mxu0 0
  %617 = vmatpush1.bf16.msra.mxu0 0
  %618 = vmatprep.subr.bf16.mxu0 0
  %619 = vmatpush1.bf16.msra.mxu0 0
  %620 = vmatprep.subr.bf16.mxu0 0
  %621 = vmatpush1.bf16.msra.mxu0 0
  %622 = vmatprep.subr.bf16.mxu0 0
  %623 = vmatpush1.bf16.msra.mxu0 0
  %624 = vmatprep.subr.bf16.mxu0 0
  %625 = vmatpush1.bf16.msra.mxu0 0
  %626 = vmatprep.subr.bf16.mxu0 0
  %627 = vmatpush1.bf16.msra.mxu0 0
  %628 = vmatprep.subr.bf16.mxu0 0
  %629 = vmatpush1.bf16.msra.mxu0 0
  %630 = vmatprep.subr.bf16.mxu0 0
  %631 = vmatpush1.bf16.msra.mxu0 0
  %632 = vmatprep.mubr.bf16.mxu0 0
  %633 = vmatmul.mubr.bf16.gmra.mrb[0].mxu0 %v380
  %v634 = vpop.f32.mrb[0].mxu0
  %v635 = vadd.f32 0.0, %v634
  %v636 = vpop.f32.mrb[0].mxu0
  %v637 = vpop.f32.mrb[0].mxu0
  %v638 = vadd.f32 0.0, %v637
  %v639 = vpop.f32.mrb[0].mxu0
  %640 = vmatprep.mubr.bf16.mxu0 0
  %641 = vmatmul.mubr.bf16.gmra.mrb[0].mxu0 %v383
  %v642 = vpop.f32.mrb[0].mxu0
  %v643 = vadd.f32 0.0, %v642
  %v644 = vpop.f32.mrb[0].mxu0
  %v645 = vpop.f32.mrb[0].mxu0
  %v646 = vadd.f32 0.0, %v645
  %v647 = vpop.f32.mrb[0].mxu0
  %648 = vmatprep.mubr.bf16.mxu0 0
  %649 = vmatmul.mubr.bf16.gmra.mrb[0].mxu0 %v386
  %v650 = vpop.f32.mrb[0].mxu0
  %v651 = vadd.f32 0.0, %v650
  %v652 = vpop.f32.mrb[0].mxu0
  %v653 = vpop.f32.mrb[0].mxu0
  %v654 = vadd.f32 0.0, %v653
  %v655 = vpop.f32.mrb[0].mxu0
  %656 = vmatprep.mubr.bf16.mxu0 0
  %657 = vmatmul.mubr.bf16.gmra.mrb[0].mxu0 %v389
  %v658 = vpop.f32.mrb[0].mxu0
  %v659 = vadd.f32 0.0, %v658
  %v660 = vpop.f32.mrb[0].mxu0
  %v661 = vpop.f32.mrb[0].mxu0
  %v662 = vadd.f32 0.0, %v661
  %v663 = vpop.f32.mrb[0].mxu0
  %664 = vmatprep.mubr.bf16.mxu0 0
  %665 = vmatmul.mubr.bf16.gmra.mrb[0].mxu0 %v392
  %v666 = vpop.f32.mrb[0].mxu0
  %v667 = vadd.f32 0.0, %v666
  %v668 = vpop.f32.mrb[0].mxu0
  %v669 = vpop.f32.mrb[0].mxu0
  %v670 = vadd.f32 0.0, %v669
  %v671 = vpop.f32.mrb[0].mxu0
  %672 = vdwg.mxu0
  %v673 = vmul.f32 %v635, %v343
  %v674 = vmul.f32 %v638, %v344
  %v675 = vmul.f32 %v643, %v345
  %v676 = vmul.f32 %v646, %v346
  %v677 = vmul.f32 %v651, %v347
  %v678 = vmul.f32 %v654, %v348
  %v679 = vmul.f32 %v659, %v349
  %v680 = vmul.f32 %v662, %v350
  %v681 = vmul.f32 %v667, %v351
  %v682 = vmul.f32 %v670, %v352
  %v683 = vsub.f32 %v673, %v678
  %v684 = vsub.f32 %v674, %v679
  %v685 = vsub.f32 %v675, %v680
  %v686 = vsub.f32 %v676, %v681
  %v687 = vsub.f32 %v677, %v682
  %v688 = vmul.f32 %v635, %v348
  %v689 = vmul.f32 %v638, %v349
  %v690 = vmul.f32 %v643, %v350
  %v691 = vmul.f32 %v646, %v351
  %v692 = vmul.f32 %v651, %v352
  %v693 = vmul.f32 %v654, %v343
  %v694 = vmul.f32 %v659, %v344
  %v695 = vmul.f32 %v662, %v345
  %v696 = vmul.f32 %v667, %v346
  %v697 = vmul.f32 %v670, %v347
  %v698 = vadd.f32 %v688, %v693
  %v699 = vadd.f32 %v689, %v694
  %v700 = vadd.f32 %v690, %v695
  %v701 = vadd.f32 %v691, %v696
  %v702 = vadd.f32 %v692, %v697
  %v703 = vpack.c.bf16 %v684, %v683
  %v704 = vpack.c.bf16 %v686, %v685
  %v705 = vpack.c.bf16 %v698, %v687
  %v706 = vpack.c.bf16 %v700, %v699
  %v707 = vpack.c.bf16 %v702, %v701
  %708 = vmatprep.subr.bf16.mxu0 0
  %709 = vmatpush1.bf16.msra.mxu0 %v703
  %710 = vmatprep.subr.bf16.mxu0 0
  %711 = vmatpush1.bf16.msra.mxu0 %v704
  %712 = vmatprep.subr.bf16.mxu0 0
  %713 = vmatpush1.bf16.msra.mxu0 %v705
  %714 = vmatprep.subr.bf16.mxu0 0
  %715 = vmatpush1.bf16.msra.mxu0 %v706
  %716 = vmatprep.subr.bf16.mxu0 0
  %717 = vmatpush1.bf16.msra.mxu0 %v707
  %718 = vmatprep.subr.bf16.mxu0 0
  %719 = vmatpush1.bf16.msra.mxu0 0
  %720 = vmatprep.subr.bf16.mxu0 0
  %721 = vmatpush1.bf16.msra.mxu0 0
  %722 = vmatprep.subr.bf16.mxu0 0
  %723 = vmatpush1.bf16.msra.mxu0 0
  %724 = vmatprep.subr.bf16.mxu0 0
  %725 = vmatpush1.bf16.msra.mxu0 0
  %726 = vmatprep.subr.bf16.mxu0 0
  %727 = vmatpush1.bf16.msra.mxu0 0
  %728 = vmatprep.subr.bf16.mxu0 0
  %729 = vmatpush1.bf16.msra.mxu0 0
  %730 = vmatprep.subr.bf16.mxu0 0
  %731 = vmatpush1.bf16.msra.mxu0 0
  %732 = vmatprep.subr.bf16.mxu0 0
  %733 = vmatpush1.bf16.msra.mxu0 0
  %734 = vmatprep.subr.bf16.mxu0 0
  %735 = vmatpush1.bf16.msra.mxu0 0
  %736 = vmatprep.subr.bf16.mxu0 0
  %737 = vmatpush1.bf16.msra.mxu0 0
  %738 = vmatprep.subr.bf16.mxu0 0
  %739 = vmatpush1.bf16.msra.mxu0 0
  %740 = vmatprep.mubr.bf16.mxu0 0
  %741 = vmatmul.mubr.bf16.gmra.mrb[0].mxu0 %v524
  %v742 = vpop.f32.mrb[0].mxu0
  %v743 = vadd.f32 0.0, %v742
  %v744 = vpop.f32.mrb[0].mxu0
  %v745 = vpop.f32.mrb[0].mxu0
  %v746 = vadd.f32 0.0, %v745
  %v747 = vpop.f32.mrb[0].mxu0
  %748 = vmatprep.mubr.bf16.mxu0 0
  %749 = vmatmul.mubr.bf16.gmra.mrb[0].mxu0 %v527
  %v750 = vpop.f32.mrb[0].mxu0
  %v751 = vadd.f32 0.0, %v750
  %v752 = vpop.f32.mrb[0].mxu0
  %v753 = vpop.f32.mrb[0].mxu0
  %v754 = vadd.f32 0.0, %v753
  %v755 = vpop.f32.mrb[0].mxu0
  %756 = vmatprep.mubr.bf16.mxu0 0
  %757 = vmatmul.mubr.bf16.gmra.mrb[0].mxu0 %v530
  %v758 = vpop.f32.mrb[0].mxu0
  %v759 = vadd.f32 0.0, %v758
  %v760 = vpop.f32.mrb[0].mxu0
  %v761 = vpop.f32.mrb[0].mxu0
  %v762 = vadd.f32 0.0, %v761
  %v763 = vpop.f32.mrb[0].mxu0
  %764 = vmatprep.mubr.bf16.mxu0 0
  %765 = vmatmul.mubr.bf16.gmra.mrb[0].mxu0 %v533
  %v766 = vpop.f32.mrb[0].mxu0
  %v767 = vadd.f32 0.0, %v766
  %v768 = vpop.f32.mrb[0].mxu0
  %v769 = vpop.f32.mrb[0].mxu0
  %v770 = vadd.f32 0.0, %v769
  %v771 = vpop.f32.mrb[0].mxu0
  %772 = vdwg.mxu0
  %v773 = vld [vmem:[%s7] sm:$0x1]
  %v774 = vld [vmem:[%s8] sm:$0x1]
  %v775 = vsel %vm63, %v570, 0.0
  %776 = vadd.xlane.f32.xlu0 %v775
  %v777 = vpop.xlane.xlu0 %776
  %v778 = vsel %vm63, %v573, 0.0
  %779 = vadd.xlane.f32.xlu0 %v778
  %v780 = vpop.xlane.xlu0 %779
  %v781 = vsel %vm63, %v578, 0.0
  %782 = vadd.xlane.f32.xlu0 %v781
  %v783 = vpop.xlane.xlu0 %782
  %v784 = vsel %vm63, %v581, 0.0
  %785 = vadd.xlane.f32.xlu0 %v784
  %v786 = vpop.xlane.xlu0 %785
  %v787 = vsel %vm63, %v586, 0.0
  %788 = vadd.xlane.f32.xlu0 %v787
  %v789 = vpop.xlane.xlu0 %788
  %v790 = vsel %vm63, %v589, 0.0
  %791 = vadd.xlane.f32.xlu0 %v790
  %v792 = vpop.xlane.xlu0 %791
  %v793 = vsel %vm63, %v594, 0.0
  %794 = vadd.xlane.f32.xlu0 %v793
  %v795 = vpop.xlane.xlu0 %794
  %v796 = vsel %vm63, %v597, 0.0
  %797 = vadd.xlane.f32.xlu0 %v796
  %v798 = vpop.xlane.xlu0 %797
  %v799 = vsel %vm63, %v743, 0.0
  %800 = vadd.xlane.f32.xlu0 %v799
  %v801 = vpop.xlane.xlu0 %800
  %v802 = vsel %vm63, %v746, 0.0
  %803 = vadd.xlane.f32.xlu0 %v802
  %v804 = vpop.xlane.xlu0 %803
  %v805 = vsel %vm63, %v751, 0.0
  %806 = vadd.xlane.f32.xlu0 %v805
  %v807 = vpop.xlane.xlu0 %806
  %v808 = vsel %vm63, %v754, 0.0
  %809 = vadd.xlane.f32.xlu0 %v808
  %v810 = vpop.xlane.xlu0 %809
  %v811 = vsel %vm63, %v759, 0.0
  %812 = vadd.xlane.f32.xlu0 %v811
  %v813 = vpop.xlane.xlu0 %812
  %v814 = vsel %vm63, %v762, 0.0
  %815 = vadd.xlane.f32.xlu0 %v814
  %v816 = vpop.xlane.xlu0 %815
  %v817 = vsel %vm63, %v767, 0.0
  %818 = vadd.xlane.f32.xlu0 %v817
  %v819 = vpop.xlane.xlu0 %818
  %v820 = vsel %vm63, %v770, 0.0
  %821 = vadd.xlane.f32.xlu0 %v820
  %v822 = vpop.xlane.xlu0 %821
  %v823 = vmul.f32 %v777, %v112
  %v824 = vmul.f32 %v780, %v112
  %v825 = vmul.f32 %v783, %v112
  %v826 = vmul.f32 %v786, %v112
  %v827 = vmul.f32 %v789, %v112
  %v828 = vmul.f32 %v792, %v112
  %v829 = vmul.f32 %v795, %v112
  %v830 = vmul.f32 %v798, %v112
  %v831 = vmul.f32 %v801, %v112
  %v832 = vmul.f32 %v804, %v112
  %v833 = vmul.f32 %v807, %v112
  %v834 = vmul.f32 %v810, %v112
  %v835 = vmul.f32 %v813, %v112
  %v836 = vmul.f32 %v816, %v112
  %v837 = vmul.f32 %v819, %v112
  %v838 = vmul.f32 %v822, %v112
  %v839 = vsub.f32 %v570, %v823
  %v840 = vsub.f32 %v573, %v824
  %v841 = vsub.f32 %v578, %v825
  %v842 = vsub.f32 %v581, %v826
  %v843 = vsub.f32 %v586, %v827
  %v844 = vsub.f32 %v589, %v828
  %v845 = vsub.f32 %v594, %v829
  %v846 = vsub.f32 %v597, %v830
  %v847 = vsub.f32 %v743, %v831
  %v848 = vsub.f32 %v746, %v832
  %v849 = vsub.f32 %v751, %v833
  %v850 = vsub.f32 %v754, %v834
  %v851 = vsub.f32 %v759, %v835
  %v852 = vsub.f32 %v762, %v836
  %v853 = vsub.f32 %v767, %v837
  %v854 = vsub.f32 %v770, %v838
  %v855 = vmul.f32 %v839, %v839
  %v856 = vmul.f32 %v840, %v840
  %v857 = vmul.f32 %v841, %v841
  %v858 = vmul.f32 %v842, %v842
  %v859 = vmul.f32 %v843, %v843
  %v860 = vmul.f32 %v844, %v844
  %v861 = vmul.f32 %v845, %v845
  %v862 = vmul.f32 %v846, %v846
  %v863 = vmul.f32 %v847, %v847
  %v864 = vmul.f32 %v848, %v848
  %v865 = vmul.f32 %v849, %v849
  %v866 = vmul.f32 %v850, %v850
  %v867 = vmul.f32 %v851, %v851
  %v868 = vmul.f32 %v852, %v852
  %v869 = vmul.f32 %v853, %v853
  %v870 = vmul.f32 %v854, %v854
  %v871 = vsel %vm63, %v855, 0.0
  %872 = vadd.xlane.f32.xlu0 %v871
  %v873 = vpop.xlane.xlu0 %872
  %v874 = vsel %vm63, %v856, 0.0
  %875 = vadd.xlane.f32.xlu0 %v874
  %v876 = vpop.xlane.xlu0 %875
  %v877 = vsel %vm63, %v857, 0.0
  %878 = vadd.xlane.f32.xlu0 %v877
  %v879 = vpop.xlane.xlu0 %878
  %v880 = vsel %vm63, %v858, 0.0
  %881 = vadd.xlane.f32.xlu0 %v880
  %v882 = vpop.xlane.xlu0 %881
  %v883 = vsel %vm63, %v859, 0.0
  %884 = vadd.xlane.f32.xlu0 %v883
  %v885 = vpop.xlane.xlu0 %884
  %v886 = vsel %vm63, %v860, 0.0
  %887 = vadd.xlane.f32.xlu0 %v886
  %v888 = vpop.xlane.xlu0 %887
  %v889 = vsel %vm63, %v861, 0.0
  %890 = vadd.xlane.f32.xlu0 %v889
  %v891 = vpop.xlane.xlu0 %890
  %v892 = vsel %vm63, %v862, 0.0
  %893 = vadd.xlane.f32.xlu0 %v892
  %v894 = vpop.xlane.xlu0 %893
  %v895 = vsel %vm63, %v863, 0.0
  %896 = vadd.xlane.f32.xlu0 %v895
  %v897 = vpop.xlane.xlu0 %896
  %v898 = vsel %vm63, %v864, 0.0
  %899 = vadd.xlane.f32.xlu0 %v898
  %v900 = vpop.xlane.xlu0 %899
  %v901 = vsel %vm63, %v865, 0.0
  %902 = vadd.xlane.f32.xlu0 %v901
  %v903 = vpop.xlane.xlu0 %902
  %v904 = vsel %vm63, %v866, 0.0
  %905 = vadd.xlane.f32.xlu0 %v904
  %v906 = vpop.xlane.xlu0 %905
  %v907 = vsel %vm63, %v867, 0.0
  %908 = vadd.xlane.f32.xlu0 %v907
  %v909 = vpop.xlane.xlu0 %908
  %v910 = vsel %vm63, %v868, 0.0
  %911 = vadd.xlane.f32.xlu0 %v910
  %v912 = vpop.xlane.xlu0 %911
  %v913 = vsel %vm63, %v869, 0.0
  %914 = vadd.xlane.f32.xlu0 %v913
  %v915 = vpop.xlane.xlu0 %914
  %v916 = vsel %vm63, %v870, 0.0
  %917 = vadd.xlane.f32.xlu0 %v916
  %v918 = vpop.xlane.xlu0 %917
  %v919 = vmul.f32 %v873, %v112
  %v920 = vmul.f32 %v876, %v112
  %v921 = vmul.f32 %v879, %v112
  %v922 = vmul.f32 %v882, %v112
  %v923 = vmul.f32 %v885, %v112
  %v924 = vmul.f32 %v888, %v112
  %v925 = vmul.f32 %v891, %v112
  %v926 = vmul.f32 %v894, %v112
  %v927 = vmul.f32 %v897, %v112
  %v928 = vmul.f32 %v900, %v112
  %v929 = vmul.f32 %v903, %v112
  %v930 = vmul.f32 %v906, %v112
  %v931 = vmul.f32 %v909, %v112
  %v932 = vmul.f32 %v912, %v112
  %v933 = vmul.f32 %v915, %v112
  %v934 = vmul.f32 %v918, %v112
  %v935 = vadd.f32 %v919, 1e-05
  %v936 = vadd.f32 %v920, 1e-05
  %v937 = vadd.f32 %v921, 1e-05
  %v938 = vadd.f32 %v922, 1e-05
  %v939 = vadd.f32 %v923, 1e-05
  %v940 = vadd.f32 %v924, 1e-05
  %v941 = vadd.f32 %v925, 1e-05
  %v942 = vadd.f32 %v926, 1e-05
  %v943 = vadd.f32 %v927, 1e-05
  %v944 = vadd.f32 %v928, 1e-05
  %v945 = vadd.f32 %v929, 1e-05
  %v946 = vadd.f32 %v930, 1e-05
  %v947 = vadd.f32 %v931, 1e-05
  %v948 = vadd.f32 %v932, 1e-05
  %v949 = vadd.f32 %v933, 1e-05
  %v950 = vadd.f32 %v934, 1e-05
  %v951 = vrsqrt.pop %v935
  %v952 = vrsqrt.pop %v936
  %v953 = vrsqrt.pop %v937
  %v954 = vrsqrt.pop %v938
  %v955 = vrsqrt.pop %v939
  %v956 = vrsqrt.pop %v940
  %v957 = vrsqrt.pop %v941
  %v958 = vrsqrt.pop %v942
  %v959 = vrsqrt.pop %v943
  %v960 = vrsqrt.pop %v944
  %v961 = vrsqrt.pop %v945
  %v962 = vrsqrt.pop %v946
  %v963 = vrsqrt.pop %v947
  %v964 = vrsqrt.pop %v948
  %v965 = vrsqrt.pop %v949
  %v966 = vrsqrt.pop %v950
  %v967 = vmul.f32 %v839, %v951
  %v968 = vmul.f32 %v840, %v952
  %v969 = vmul.f32 %v841, %v953
  %v970 = vmul.f32 %v842, %v954
  %v971 = vmul.f32 %v843, %v955
  %v972 = vmul.f32 %v844, %v956
  %v973 = vmul.f32 %v845, %v957
  %v974 = vmul.f32 %v846, %v958
  %v975 = vmul.f32 %v847, %v959
  %v976 = vmul.f32 %v848, %v960
  %v977 = vmul.f32 %v849, %v961
  %v978 = vmul.f32 %v850, %v962
  %v979 = vmul.f32 %v851, %v963
  %v980 = vmul.f32 %v852, %v964
  %v981 = vmul.f32 %v853, %v965
  %v982 = vmul.f32 %v854, %v966
  %v984 = vlaneseq
  %v985 = vshrl.u32 %v984, 7
  %v986 = vsub.s32 0, %v985
  %v987 = vrot.slane %v773, %v986
  %v989 = vmul.f32 %v967, %v987
  %v990 = vmul.f32 %v968, %v987
  %v991 = vmul.f32 %v969, %v987
  %v992 = vmul.f32 %v970, %v987
  %v993 = vmul.f32 %v971, %v987
  %v994 = vmul.f32 %v972, %v987
  %v995 = vmul.f32 %v973, %v987
  %v996 = vmul.f32 %v974, %v987
  %v997 = vmul.f32 %v975, %v987
  %v998 = vmul.f32 %v976, %v987
  %v999 = vmul.f32 %v977, %v987
  %v1000 = vmul.f32 %v978, %v987
  %v1001 = vmul.f32 %v979, %v987
  %v1002 = vmul.f32 %v980, %v987
  %v1003 = vmul.f32 %v981, %v987
  %v1004 = vmul.f32 %v982, %v987
  %v1006 = vlaneseq
  %v1007 = vshrl.u32 %v1006, 7
  %v1008 = vsub.s32 0, %v1007
  %v1009 = vrot.slane %v774, %v1008
  %v1011 = vadd.f32 %v989, %v1009
  %v1012 = vadd.f32 %v990, %v1009
  %v1013 = vadd.f32 %v991, %v1009
  %v1014 = vadd.f32 %v992, %v1009
  %v1015 = vadd.f32 %v993, %v1009
  %v1016 = vadd.f32 %v994, %v1009
  %v1017 = vadd.f32 %v995, %v1009
  %v1018 = vadd.f32 %v996, %v1009
  %v1019 = vadd.f32 %v997, %v1009
  %v1020 = vadd.f32 %v998, %v1009
  %v1021 = vadd.f32 %v999, %v1009
  %v1022 = vadd.f32 %v1000, %v1009
  %v1023 = vadd.f32 %v1001, %v1009
  %v1024 = vadd.f32 %v1002, %v1009
  %v1025 = vadd.f32 %v1003, %v1009
  %v1026 = vadd.f32 %v1004, %v1009
  %v1027 = vpack.c.bf16 %v1012, %v1011
  %v1028 = vpack.c.bf16 %v1014, %v1013
  %v1029 = vpack.c.bf16 %v1016, %v1015
  %v1030 = vpack.c.bf16 %v1018, %v1017
  %v1031 = vpack.c.bf16 %v1020, %v1019
  %v1032 = vpack.c.bf16 %v1022, %v1021
  %v1033 = vpack.c.bf16 %v1024, %v1023
  %v1034 = vpack.c.bf16 %v1026, %v1025
  %v1035 = vld [vmem:[%s9] sm:$0xf]
  %v1036 = vld [vmem:[%s9 + $0x4] sm:$0xf]
  %v1037 = vld [vmem:[%s9 + $0x8] sm:$0xf]
  %v1038 = vld [vmem:[%s9 + $0xc] sm:$0xf]
  %v1039 = vld [vmem:[%s10] sm:$0x1]
  %v1041 = vlaneseq
  %v1042 = vshrl.u32 %v1041, 7
  %v1043 = vsub.s32 0, %v1042
  %v1044 = vrot.slane %v1039, %v1043
  %v1050 = vunpack.c.l.b16 %v1035
  %v1051 = vunpack.c.l.b16 %v1036
  %v1052 = vunpack.c.l.b16 %v1037
  %v1053 = vunpack.c.l.b16 %v1038
  %v1054 = vpack.c.b16 %v1051, %v1050
  %v1055 = vpack.c.b16 %v1053, %v1052
  %v1059 = vsel %vm63, %v1027, 0
  %v1062 = vsel %vm63, %v1028, 0
  %v1065 = vsel %vm63, %v1029, 0
  %v1068 = vsel %vm63, %v1030, 0
  %v1071 = vsel %vm63, %v1031, 0
  %v1074 = vsel %vm63, %v1032, 0
  %v1077 = vsel %vm63, %v1033, 0
  %v1080 = vsel %vm63, %v1034, 0
  %1082 = vmatprep.subr.bf16.mxu0 0
  %1083 = vmatpush1.bf16.msra.mxu0 %v1054
  %1084 = vmatprep.subr.bf16.mxu0 0
  %1085 = vmatpush1.bf16.msra.mxu0 %v1055
  %1086 = vmatprep.subr.bf16.mxu0 0
  %1087 = vmatpush1.bf16.msra.mxu0 0
  %1088 = vmatprep.subr.bf16.mxu0 0
  %1089 = vmatpush1.bf16.msra.mxu0 0
  %1090 = vmatprep.subr.bf16.mxu0 0
  %1091 = vmatpush1.bf16.msra.mxu0 0
  %1092 = vmatprep.subr.bf16.mxu0 0
  %1093 = vmatpush1.bf16.msra.mxu0 0
  %1094 = vmatprep.subr.bf16.mxu0 0
  %1095 = vmatpush1.bf16.msra.mxu0 0
  %1096 = vmatprep.subr.bf16.mxu0 0
  %1097 = vmatpush1.bf16.msra.mxu0 0
  %1098 = vmatprep.subr.bf16.mxu0 0
  %1099 = vmatpush1.bf16.msra.mxu0 0
  %1100 = vmatprep.subr.bf16.mxu0 0
  %1101 = vmatpush1.bf16.msra.mxu0 0
  %1102 = vmatprep.subr.bf16.mxu0 0
  %1103 = vmatpush1.bf16.msra.mxu0 0
  %1104 = vmatprep.subr.bf16.mxu0 0
  %1105 = vmatpush1.bf16.msra.mxu0 0
  %1106 = vmatprep.subr.bf16.mxu0 0
  %1107 = vmatpush1.bf16.msra.mxu0 0
  %1108 = vmatprep.subr.bf16.mxu0 0
  %1109 = vmatpush1.bf16.msra.mxu0 0
  %1110 = vmatprep.subr.bf16.mxu0 0
  %1111 = vmatpush1.bf16.msra.mxu0 0
  %1112 = vmatprep.subr.bf16.mxu0 0
  %1113 = vmatpush1.bf16.msra.mxu0 0
  %1114 = vmatprep.mubr.bf16.mxu0 0
  %1115 = vmatmul.mubr.bf16.gmra.mrb[0].mxu0 %v1059
  %v1116 = vpop.f32.mrb[0].mxu0
  %v1117 = vadd.f32 %v1044, %v1116
  %v1118 = vpop.f32.mrb[0].mxu0
  %v1119 = vpop.f32.mrb[0].mxu0
  %v1120 = vadd.f32 %v1044, %v1119
  %v1121 = vpop.f32.mrb[0].mxu0
  %1122 = vmatprep.mubr.bf16.mxu0 0
  %1123 = vmatmul.mubr.bf16.gmra.mrb[0].mxu0 %v1062
  %v1124 = vpop.f32.mrb[0].mxu0
  %v1125 = vadd.f32 %v1044, %v1124
  %v1126 = vpop.f32.mrb[0].mxu0
  %v1127 = vpop.f32.mrb[0].mxu0
  %v1128 = vadd.f32 %v1044, %v1127
  %v1129 = vpop.f32.mrb[0].mxu0
  %1130 = vmatprep.mubr.bf16.mxu0 0
  %1131 = vmatmul.mubr.bf16.gmra.mrb[0].mxu0 %v1065
  %v1132 = vpop.f32.mrb[0].mxu0
  %v1133 = vadd.f32 %v1044, %v1132
  %v1134 = vpop.f32.mrb[0].mxu0
  %v1135 = vpop.f32.mrb[0].mxu0
  %v1136 = vadd.f32 %v1044, %v1135
  %v1137 = vpop.f32.mrb[0].mxu0
  %1138 = vmatprep.mubr.bf16.mxu0 0
  %1139 = vmatmul.mubr.bf16.gmra.mrb[0].mxu0 %v1068
  %v1140 = vpop.f32.mrb[0].mxu0
  %v1141 = vadd.f32 %v1044, %v1140
  %v1142 = vpop.f32.mrb[0].mxu0
  %v1143 = vpop.f32.mrb[0].mxu0
  %v1144 = vadd.f32 %v1044, %v1143
  %v1145 = vpop.f32.mrb[0].mxu0
  %1146 = vmatprep.mubr.bf16.mxu0 0
  %1147 = vmatmul.mubr.bf16.gmra.mrb[0].mxu0 %v1071
  %v1148 = vpop.f32.mrb[0].mxu0
  %v1149 = vadd.f32 %v1044, %v1148
  %v1150 = vpop.f32.mrb[0].mxu0
  %v1151 = vpop.f32.mrb[0].mxu0
  %v1152 = vadd.f32 %v1044, %v1151
  %v1153 = vpop.f32.mrb[0].mxu0
  %1154 = vmatprep.mubr.bf16.mxu0 0
  %1155 = vmatmul.mubr.bf16.gmra.mrb[0].mxu0 %v1074
  %v1156 = vpop.f32.mrb[0].mxu0
  %v1157 = vadd.f32 %v1044, %v1156
  %v1158 = vpop.f32.mrb[0].mxu0
  %v1159 = vpop.f32.mrb[0].mxu0
  %v1160 = vadd.f32 %v1044, %v1159
  %v1161 = vpop.f32.mrb[0].mxu0
  %1162 = vmatprep.mubr.bf16.mxu0 0
  %1163 = vmatmul.mubr.bf16.gmra.mrb[0].mxu0 %v1077
  %v1164 = vpop.f32.mrb[0].mxu0
  %v1165 = vadd.f32 %v1044, %v1164
  %v1166 = vpop.f32.mrb[0].mxu0
  %v1167 = vpop.f32.mrb[0].mxu0
  %v1168 = vadd.f32 %v1044, %v1167
  %v1169 = vpop.f32.mrb[0].mxu0
  %1170 = vmatprep.mubr.bf16.mxu0 0
  %1171 = vmatmul.mubr.bf16.gmra.mrb[0].mxu0 %v1080
  %v1172 = vpop.f32.mrb[0].mxu0
  %v1173 = vadd.f32 %v1044, %v1172
  %v1174 = vpop.f32.mrb[0].mxu0
  %v1175 = vpop.f32.mrb[0].mxu0
  %v1176 = vadd.f32 %v1044, %v1175
  %v1177 = vpop.f32.mrb[0].mxu0
  %1178 = vdwg.mxu0
  %v1179 = vmul.f32 %v1117, 0.5
  %v1180 = vmul.f32 %v1120, 0.5
  %v1181 = vmul.f32 %v1125, 0.5
  %v1182 = vmul.f32 %v1128, 0.5
  %v1183 = vmul.f32 %v1133, 0.5
  %v1184 = vmul.f32 %v1136, 0.5
  %v1185 = vmul.f32 %v1141, 0.5
  %v1186 = vmul.f32 %v1144, 0.5
  %v1187 = vmul.f32 %v1149, 0.5
  %v1188 = vmul.f32 %v1152, 0.5
  %v1189 = vmul.f32 %v1157, 0.5
  %v1190 = vmul.f32 %v1160, 0.5
  %v1191 = vmul.f32 %v1165, 0.5
  %v1192 = vmul.f32 %v1168, 0.5
  %v1193 = vmul.f32 %v1173, 0.5
  %v1194 = vmul.f32 %v1176, 0.5
  %v1195 = vmul.f32 %v1117, 0.044715
  %v1196 = vmul.f32 %v1120, 0.044715
  %v1197 = vmul.f32 %v1125, 0.044715
  %v1198 = vmul.f32 %v1128, 0.044715
  %v1199 = vmul.f32 %v1133, 0.044715
  %v1200 = vmul.f32 %v1136, 0.044715
  %v1201 = vmul.f32 %v1141, 0.044715
  %v1202 = vmul.f32 %v1144, 0.044715
  %v1203 = vmul.f32 %v1149, 0.044715
  %v1204 = vmul.f32 %v1152, 0.044715
  %v1205 = vmul.f32 %v1157, 0.044715
  %v1206 = vmul.f32 %v1160, 0.044715
  %v1207 = vmul.f32 %v1165, 0.044715
  %v1208 = vmul.f32 %v1168, 0.044715
  %v1209 = vmul.f32 %v1173, 0.044715
  %v1210 = vmul.f32 %v1176, 0.044715
  %v1211 = vmul.f32 %v1195, %v1117
  %v1212 = vmul.f32 %v1196, %v1120
  %v1213 = vmul.f32 %v1197, %v1125
  %v1214 = vmul.f32 %v1198, %v1128
  %v1215 = vmul.f32 %v1199, %v1133
  %v1216 = vmul.f32 %v1200, %v1136
  %v1217 = vmul.f32 %v1201, %v1141
  %v1218 = vmul.f32 %v1202, %v1144
  %v1219 = vmul.f32 %v1203, %v1149
  %v1220 = vmul.f32 %v1204, %v1152
  %v1221 = vmul.f32 %v1205, %v1157
  %v1222 = vmul.f32 %v1206, %v1160
  %v1223 = vmul.f32 %v1207, %v1165
  %v1224 = vmul.f32 %v1208, %v1168
  %v1225 = vmul.f32 %v1209, %v1173
  %v1226 = vmul.f32 %v1210, %v1176
  %v1227 = vmul.f32 %v1211, %v1117
  %v1228 = vmul.f32 %v1212, %v1120
  %v1229 = vmul.f32 %v1213, %v1125
  %v1230 = vmul.f32 %v1214, %v1128
  %v1231 = vmul.f32 %v1215, %v1133
  %v1232 = vmul.f32 %v1216, %v1136
  %v1233 = vmul.f32 %v1217, %v1141
  %v1234 = vmul.f32 %v1218, %v1144
  %v1235 = vmul.f32 %v1219, %v1149
  %v1236 = vmul.f32 %v1220, %v1152
  %v1237 = vmul.f32 %v1221, %v1157
  %v1238 = vmul.f32 %v1222, %v1160
  %v1239 = vmul.f32 %v1223, %v1165
  %v1240 = vmul.f32 %v1224, %v1168
  %v1241 = vmul.f32 %v1225, %v1173
  %v1242 = vmul.f32 %v1226, %v1176
  %v1243 = vadd.f32 %v1117, %v1227
  %v1244 = vadd.f32 %v1120, %v1228
  %v1245 = vadd.f32 %v1125, %v1229
  %v1246 = vadd.f32 %v1128, %v1230
  %v1247 = vadd.f32 %v1133, %v1231
  %v1248 = vadd.f32 %v1136, %v1232
  %v1249 = vadd.f32 %v1141, %v1233
  %v1250 = vadd.f32 %v1144, %v1234
  %v1251 = vadd.f32 %v1149, %v1235
  %v1252 = vadd.f32 %v1152, %v1236
  %v1253 = vadd.f32 %v1157, %v1237
  %v1254 = vadd.f32 %v1160, %v1238
  %v1255 = vadd.f32 %v1165, %v1239
  %v1256 = vadd.f32 %v1168, %v1240
  %v1257 = vadd.f32 %v1173, %v1241
  %v1258 = vadd.f32 %v1176, %v1242
  %v1259 = vmul.f32 %v1243, 0.7978846
  %v1260 = vmul.f32 %v1244, 0.7978846
  %v1261 = vmul.f32 %v1245, 0.7978846
  %v1262 = vmul.f32 %v1246, 0.7978846
  %v1263 = vmul.f32 %v1247, 0.7978846
  %v1264 = vmul.f32 %v1248, 0.7978846
  %v1265 = vmul.f32 %v1249, 0.7978846
  %v1266 = vmul.f32 %v1250, 0.7978846
  %v1267 = vmul.f32 %v1251, 0.7978846
  %v1268 = vmul.f32 %v1252, 0.7978846
  %v1269 = vmul.f32 %v1253, 0.7978846
  %v1270 = vmul.f32 %v1254, 0.7978846
  %v1271 = vmul.f32 %v1255, 0.7978846
  %v1272 = vmul.f32 %v1256, 0.7978846
  %v1273 = vmul.f32 %v1257, 0.7978846
  %v1274 = vmul.f32 %v1258, 0.7978846
  %v1275 = vtanh.pop %v1259
  %v1276 = vtanh.pop %v1260
  %v1277 = vtanh.pop %v1261
  %v1278 = vtanh.pop %v1262
  %v1279 = vtanh.pop %v1263
  %v1280 = vtanh.pop %v1264
  %v1281 = vtanh.pop %v1265
  %v1282 = vtanh.pop %v1266
  %v1283 = vtanh.pop %v1267
  %v1284 = vtanh.pop %v1268
  %v1285 = vtanh.pop %v1269
  %v1286 = vtanh.pop %v1270
  %v1287 = vtanh.pop %v1271
  %v1288 = vtanh.pop %v1272
  %v1289 = vtanh.pop %v1273
  %v1290 = vtanh.pop %v1274
  %v1291 = vadd.f32 %v1275, 1.0
  %v1292 = vadd.f32 %v1276, 1.0
  %v1293 = vadd.f32 %v1277, 1.0
  %v1294 = vadd.f32 %v1278, 1.0
  %v1295 = vadd.f32 %v1279, 1.0
  %v1296 = vadd.f32 %v1280, 1.0
  %v1297 = vadd.f32 %v1281, 1.0
  %v1298 = vadd.f32 %v1282, 1.0
  %v1299 = vadd.f32 %v1283, 1.0
  %v1300 = vadd.f32 %v1284, 1.0
  %v1301 = vadd.f32 %v1285, 1.0
  %v1302 = vadd.f32 %v1286, 1.0
  %v1303 = vadd.f32 %v1287, 1.0
  %v1304 = vadd.f32 %v1288, 1.0
  %v1305 = vadd.f32 %v1289, 1.0
  %v1306 = vadd.f32 %v1290, 1.0
  %v1307 = vmul.f32 %v1179, %v1291
  %v1308 = vmul.f32 %v1180, %v1292
  %v1309 = vmul.f32 %v1181, %v1293
  %v1310 = vmul.f32 %v1182, %v1294
  %v1311 = vmul.f32 %v1183, %v1295
  %v1312 = vmul.f32 %v1184, %v1296
  %v1313 = vmul.f32 %v1185, %v1297
  %v1314 = vmul.f32 %v1186, %v1298
  %v1315 = vmul.f32 %v1187, %v1299
  %v1316 = vmul.f32 %v1188, %v1300
  %v1317 = vmul.f32 %v1189, %v1301
  %v1318 = vmul.f32 %v1190, %v1302
  %v1319 = vmul.f32 %v1191, %v1303
  %v1320 = vmul.f32 %v1192, %v1304
  %v1321 = vmul.f32 %v1193, %v1305
  %v1322 = vmul.f32 %v1194, %v1306
  %v1323 = vpack.c.bf16 %v1308, %v1307
  %v1324 = vpack.c.bf16 %v1310, %v1309
  %v1325 = vpack.c.bf16 %v1312, %v1311
  %v1326 = vpack.c.bf16 %v1314, %v1313
  %v1327 = vpack.c.bf16 %v1316, %v1315
  %v1328 = vpack.c.bf16 %v1318, %v1317
  %v1329 = vpack.c.bf16 %v1320, %v1319
  %v1330 = vpack.c.bf16 %v1322, %v1321
  %v1331 = vld [vmem:[%s11] sm:$0xf]
  %v1332 = vld [vmem:[%s11 + $0x4] sm:$0xf]
  %v1333 = vld [vmem:[%s11 + $0x8] sm:$0xf]
  %v1334 = vld [vmem:[%s11 + $0xc] sm:$0xf]
  %v1335 = vld [vmem:[%s11 + $0x10] sm:$0xf]
  %v1336 = vld [vmem:[%s11 + $0x14] sm:$0xf]
  %v1337 = vld [vmem:[%s11 + $0x18] sm:$0xf]
  %v1338 = vld [vmem:[%s11 + $0x1c] sm:$0xf]
  %v1339 = vld [vmem:[%s11 + $0x20] sm:$0xf]
  %v1340 = vld [vmem:[%s11 + $0x24] sm:$0xf]
  %v1341 = vld [vmem:[%s11 + $0x28] sm:$0xf]
  %v1342 = vld [vmem:[%s11 + $0x2c] sm:$0xf]
  %v1343 = vld [vmem:[%s11 + $0x30] sm:$0xf]
  %v1344 = vld [vmem:[%s11 + $0x34] sm:$0xf]
  %v1345 = vld [vmem:[%s11 + $0x38] sm:$0xf]
  %v1346 = vld [vmem:[%s11 + $0x3c] sm:$0xf]
  %v1347 = vld [vmem:[%s12] sm:$0x1]
  %v1349 = vlaneseq
  %v1350 = vshrl.u32 %v1349, 7
  %v1351 = vsub.s32 0, %v1350
  %v1352 = vrot.slane %v1347, %v1351
  %v1370 = vunpack.c.l.b16 %v1331
  %v1371 = vunpack.c.l.b16 %v1332
  %v1372 = vunpack.c.l.b16 %v1333
  %v1373 = vunpack.c.l.b16 %v1334
  %v1374 = vunpack.c.l.b16 %v1335
  %v1375 = vunpack.c.l.b16 %v1336
  %v1376 = vunpack.c.l.b16 %v1337
  %v1377 = vunpack.c.l.b16 %v1338
  %v1378 = vunpack.c.l.b16 %v1339
  %v1379 = vunpack.c.l.b16 %v1340
  %v1380 = vunpack.c.l.b16 %v1341
  %v1381 = vunpack.c.l.b16 %v1342
  %v1382 = vunpack.c.l.b16 %v1343
  %v1383 = vunpack.c.l.b16 %v1344
  %v1384 = vunpack.c.l.b16 %v1345
  %v1385 = vunpack.c.l.b16 %v1346
  %v1386 = vpack.c.b16 %v1371, %v1370
  %v1387 = vpack.c.b16 %v1373, %v1372
  %v1388 = vpack.c.b16 %v1375, %v1374
  %v1389 = vpack.c.b16 %v1377, %v1376
  %v1390 = vpack.c.b16 %v1379, %v1378
  %v1391 = vpack.c.b16 %v1381, %v1380
  %v1392 = vpack.c.b16 %v1383, %v1382
  %v1393 = vpack.c.b16 %v1385, %v1384
  %1402 = vmatprep.subr.bf16.mxu0 0
  %1403 = vmatpush1.bf16.msra.mxu0 %v1386
  %1404 = vmatprep.subr.bf16.mxu0 0
  %1405 = vmatpush1.bf16.msra.mxu0 %v1387
  %1406 = vmatprep.subr.bf16.mxu0 0
  %1407 = vmatpush1.bf16.msra.mxu0 %v1388
  %1408 = vmatprep.subr.bf16.mxu0 0
  %1409 = vmatpush1.bf16.msra.mxu0 %v1389
  %1410 = vmatprep.subr.bf16.mxu0 0
  %1411 = vmatpush1.bf16.msra.mxu0 %v1390
  %1412 = vmatprep.subr.bf16.mxu0 0
  %1413 = vmatpush1.bf16.msra.mxu0 %v1391
  %1414 = vmatprep.subr.bf16.mxu0 0
  %1415 = vmatpush1.bf16.msra.mxu0 %v1392
  %1416 = vmatprep.subr.bf16.mxu0 0
  %1417 = vmatpush1.bf16.msra.mxu0 %v1393
  %1418 = vmatprep.subr.bf16.mxu0 0
  %1419 = vmatpush1.bf16.msra.mxu0 0
  %1420 = vmatprep.subr.bf16.mxu0 0
  %1421 = vmatpush1.bf16.msra.mxu0 0
  %1422 = vmatprep.subr.bf16.mxu0 0
  %1423 = vmatpush1.bf16.msra.mxu0 0
  %1424 = vmatprep.subr.bf16.mxu0 0
  %1425 = vmatpush1.bf16.msra.mxu0 0
  %1426 = vmatprep.subr.bf16.mxu0 0
  %1427 = vmatpush1.bf16.msra.mxu0 0
  %1428 = vmatprep.subr.bf16.mxu0 0
  %1429 = vmatpush1.bf16.msra.mxu0 0
  %1430 = vmatprep.subr.bf16.mxu0 0
  %1431 = vmatpush1.bf16.msra.mxu0 0
  %1432 = vmatprep.subr.bf16.mxu0 0
  %1433 = vmatpush1.bf16.msra.mxu0 0
  %1434 = vmatprep.mubr.bf16.mxu0 0
  %1435 = vmatmul.mubr.bf16.gmra.mrb[0].mxu0 %v1323
  %v1436 = vpop.f32.mrb[0].mxu0
  %v1437 = vadd.f32 %v1352, %v1436
  %v1438 = vpop.f32.mrb[0].mxu0
  %v1439 = vpop.f32.mrb[0].mxu0
  %v1440 = vadd.f32 %v1352, %v1439
  %v1441 = vpop.f32.mrb[0].mxu0
  %1442 = vmatprep.mubr.bf16.mxu0 0
  %1443 = vmatmul.mubr.bf16.gmra.mrb[0].mxu0 %v1324
  %v1444 = vpop.f32.mrb[0].mxu0
  %v1445 = vadd.f32 %v1352, %v1444
  %v1446 = vpop.f32.mrb[0].mxu0
  %v1447 = vpop.f32.mrb[0].mxu0
  %v1448 = vadd.f32 %v1352, %v1447
  %v1449 = vpop.f32.mrb[0].mxu0
  %1450 = vmatprep.mubr.bf16.mxu0 0
  %1451 = vmatmul.mubr.bf16.gmra.mrb[0].mxu0 %v1325
  %v1452 = vpop.f32.mrb[0].mxu0
  %v1453 = vadd.f32 %v1352, %v1452
  %v1454 = vpop.f32.mrb[0].mxu0
  %v1455 = vpop.f32.mrb[0].mxu0
  %v1456 = vadd.f32 %v1352, %v1455
  %v1457 = vpop.f32.mrb[0].mxu0
  %1458 = vmatprep.mubr.bf16.mxu0 0
  %1459 = vmatmul.mubr.bf16.gmra.mrb[0].mxu0 %v1326
  %v1460 = vpop.f32.mrb[0].mxu0
  %v1461 = vadd.f32 %v1352, %v1460
  %v1462 = vpop.f32.mrb[0].mxu0
  %v1463 = vpop.f32.mrb[0].mxu0
  %v1464 = vadd.f32 %v1352, %v1463
  %v1465 = vpop.f32.mrb[0].mxu0
  %1466 = vmatprep.mubr.bf16.mxu0 0
  %1467 = vmatmul.mubr.bf16.gmra.mrb[0].mxu0 %v1327
  %v1468 = vpop.f32.mrb[0].mxu0
  %v1469 = vadd.f32 %v1352, %v1468
  %v1470 = vpop.f32.mrb[0].mxu0
  %v1471 = vpop.f32.mrb[0].mxu0
  %v1472 = vadd.f32 %v1352, %v1471
  %v1473 = vpop.f32.mrb[0].mxu0
  %1474 = vmatprep.mubr.bf16.mxu0 0
  %1475 = vmatmul.mubr.bf16.gmra.mrb[0].mxu0 %v1328
  %v1476 = vpop.f32.mrb[0].mxu0
  %v1477 = vadd.f32 %v1352, %v1476
  %v1478 = vpop.f32.mrb[0].mxu0
  %v1479 = vpop.f32.mrb[0].mxu0
  %v1480 = vadd.f32 %v1352, %v1479
  %v1481 = vpop.f32.mrb[0].mxu0
  %1482 = vmatprep.mubr.bf16.mxu0 0
  %1483 = vmatmul.mubr.bf16.gmra.mrb[0].mxu0 %v1329
  %v1484 = vpop.f32.mrb[0].mxu0
  %v1485 = vadd.f32 %v1352, %v1484
  %v1486 = vpop.f32.mrb[0].mxu0
  %v1487 = vpop.f32.mrb[0].mxu0
  %v1488 = vadd.f32 %v1352, %v1487
  %v1489 = vpop.f32.mrb[0].mxu0
  %1490 = vmatprep.mubr.bf16.mxu0 0
  %1491 = vmatmul.mubr.bf16.gmra.mrb[0].mxu0 %v1330
  %v1492 = vpop.f32.mrb[0].mxu0
  %v1493 = vadd.f32 %v1352, %v1492
  %v1494 = vpop.f32.mrb[0].mxu0
  %v1495 = vpop.f32.mrb[0].mxu0
  %v1496 = vadd.f32 %v1352, %v1495
  %v1497 = vpop.f32.mrb[0].mxu0
  %1498 = vdwg.mxu0
  %1499 = vst.msk [vmem:[%s13] sm:$0xff] %vm63, %v1437
  %1500 = vst.msk [vmem:[%s13 + $0x8] sm:$0xff] %vm63, %v1440
  %1501 = vst.msk [vmem:[%s13 + $0x10] sm:$0xff] %vm63, %v1445
  %1502 = vst.msk [vmem:[%s13 + $0x18] sm:$0xff] %vm63, %v1448
  %1503 = vst.msk [vmem:[%s13 + $0x20] sm:$0xff] %vm63, %v1453
  %1504 = vst.msk [vmem:[%s13 + $0x28] sm:$0xff] %vm63, %v1456
  %1505 = vst.msk [vmem:[%s13 + $0x30] sm:$0xff] %vm63, %v1461
  %1506 = vst.msk [vmem:[%s13 + $0x38] sm:$0xff] %vm63, %v1464
  %1507 = vst.msk [vmem:[%s13 + $0x40] sm:$0xff] %vm63, %v1469
  %1508 = vst.msk [vmem:[%s13 + $0x48] sm:$0xff] %vm63, %v1472
  %1509 = vst.msk [vmem:[%s13 + $0x50] sm:$0xff] %vm63, %v1477
  %1510 = vst.msk [vmem:[%s13 + $0x58] sm:$0xff] %vm63, %v1480
  %1511 = vst.msk [vmem:[%s13 + $0x60] sm:$0xff] %vm63, %v1485
  %1512 = vst.msk [vmem:[%s13 + $0x68] sm:$0xff] %vm63, %v1488
  %1513 = vst.msk [vmem:[%s13 + $0x70] sm:$0xff] %vm63, %v1493
  %1514 = vst.msk [vmem:[%s13 + $0x78] sm:$0xff] %vm63, %v1496
  // Predicated region
  $region54: #{tpu_custom_call.1} parent=0 // pred_check
    _
  $region55: #{tpu_custom_call.1} parent=0 // pred_check_branch
    %1516 = sbr.rel (0) target = $region57
  $region56: #{tpu_custom_call.1} parent=0 // pred_region
    _
  $region57: #{tpu_custom_call.1} parent=0 // pred_fallthru
    _
  // Predicated region
  $region58: #{tpu_custom_call.1} parent=0 // pred_check
    _
  $region59: #{tpu_custom_call.1} parent=0 // pred_check_branch
    %1518 = sbr.rel (0) target = $region61
  $region60: #{tpu_custom_call.1} parent=0 // pred_region
    _
  $region61: #{tpu_custom_call.1} parent=0 // pred_fallthru
    _

</llo_original>
